<compile_context>
chip_gen: v6e
topology: v6e:2x2x1
jax: 0.10.0
libtpu: 0.0.40
codegen_flags: <defaults>
</compile_context>

<pallas_src>
import jax
import jax.numpy as jnp
from jax import lax
from jax.experimental import pallas as pl
from jax.experimental.pallas import tpu as pltpu


def _round_up(v, m):
    return ((v + m - 1) // m) * m


def _vmem_budget_bytes():
    """~75% of this generation's physical VMEM (48 MiB on v7x, 96 MiB on v5e/v6e)."""
    cap = 64 * 1024 * 1024  # conservative fallback (v7x physical VMEM)
    try:
        cap = int(getattr(pltpu.get_tpu_info(), "vmem_capacity_bytes", cap))
    except Exception:
        pass
    return (3 * cap) // 4


def _pick_bt(B, per_b_bytes, fixed_bytes, budget):
    """Largest batch chunk that fits the VMEM budget while keeping enough grid steps
    (>= 2, prefer >= 4, even count) for DMA pipelining / v7x megacore sharding."""
    if B <= 1:
        return 1
    avail = max(budget - fixed_bytes, per_b_bytes)
    max_fit = max(1, min(B, avail // per_b_bytes))
    target_steps = 4 if B >= 4 else 2
    bt = max(1, min(max_fit, -(-B // target_steps)))
    while bt > 1 and (-(-B // bt)) % 2 == 1:  # keep an even number of grid steps
        bt -= 1
    return bt


def _gcn_fused_kernel(adj_ref, dinv_ref, x0_ref, w0_ref, wr_ref, b2_ref, out_ref):
    """All GCN layers for one batch chunk (activations stay resident in VMEM).

    adj_ref:  (Bt, Np, Np)            adjacency chunk, MXU dtype (bf16 or f32)
    dinv_ref: (Bt, Np, 1)   f32       exact 1/(adj.sum(-1)+1), precomputed on host
    x0_ref:   (Bt, Np, Din)           node features (zero-padded), MXU dtype
    w0_ref:   (Din, Dmem)             layer-0 weight (transposed, zero-padded), MXU dtype
    wr_ref:   (max(L-1,1), Dmem, Dmem) layers 1..L-1 weights, MXU dtype
    b2_ref:   (L, 1, Dmem)  f32       per-layer 2*bias (bias appears twice in torch math)
    out_ref:  (Bt, Np, Dmem) f32      relu(((adj@x + x)@W + 2b) * dinv) after last layer
    """
    bt, n, _ = x0_ref.shape
    d_mem = out_ref.shape[-1]
    num_layers = b2_ref.shape[0]

    adj = adj_ref[...]                 # keep in MXU dtype; no full-size in-kernel cast
    mm_dtype = adj.dtype
    dinv = dinv_ref[...]               # (Bt, Np, 1) f32, exact

    def layer(x_mm, x_f32, w, b2):
        # Ax = adj.bmm(x)
        ax = jnp.einsum('bij,bjd->bid', adj, x_mm,
                        preferred_element_type=jnp.float32)            # (Bt, Np, D) f32
        # Fused projection: W(Ax)+b + W(x)+b == (Ax + x) @ W + 2b -- one tall MXU matmul.
        s = (ax + x_f32).reshape(bt * n, x_f32.shape[-1])
        proj = jnp.dot(s.astype(mm_dtype), w,
                       preferred_element_type=jnp.float32) + b2        # (Bt*Np, Dmem)
        proj = proj.reshape(bt, n, d_mem) * dinv                       # divide -> multiply
        return jnp.maximum(proj, 0.0)                                  # relu; gcn_drop = identity (eval)

    # Layer 0 (peeled: runs at Din width; x narrows to Dmem afterwards).
    x0 = x0_ref[...]
    x = layer(x0, x0.astype(jnp.float32), w0_ref[...], b2_ref[0])

    if num_layers - 1 <= 3:
        # Small L: static unroll (LLO scheduler visibility).
        for l in range(num_layers - 1):
            x = layer(x.astype(mm_dtype), x, wr_ref[l], b2_ref[l + 1])
    else:
        # Large L: fori_loop bounds live ranges to one layer's temporaries.
        def body(l, xc):
            return layer(xc.astype(mm_dtype), xc, wr_ref[l], b2_ref[l + 1])
        x = lax.fori_loop(0, num_layers - 1, body, x)

    out_ref[...] = x.astype(out_ref.dtype)


def gcn_forward(adj, gcn_inputs, weights, biases, *, batch_block=None, use_bf16=True):
    """Dense (adj_is_sparse=False), non-GAT, norm_flag=False, eval-mode GCN_Layer forward.

    adj:        (B, N, N) float32
    gcn_inputs: (B, N, in_dim) float32 (already split + padded per sequence)
    weights:    list of (Din_l, mem_dim) arrays (torch Linear weight transposed)
    biases:     list of (mem_dim,) arrays
    Returns (gcn_outputs (B, N, mem_dim), masks (B, N, 1) bool).
    """
    B, N, _ = adj.shape
    in_dim = gcn_inputs.shape[-1]
    mem_dim = weights[0].shape[1]
    L = len(weights)

    mm_dtype = jnp.bfloat16 if use_bf16 else jnp.float32
    mm_bytes = 2 if use_bf16 else 4

    # Lane-dense feature widths; pad N to 128 only when large enough to pay off
    # (N is both the lane axis of the adj tile and the contraction dim of adj@x).
    dpad_in = _round_up(in_dim, 128)
    dpad_mem = _round_up(mem_dim, 128)
    npad = _round_up(N, 128) if N >= 64 else _round_up(N, 8)

    # VMEM working set per batch element (double-buffered blocks + f32 temporaries).
    per_b = (2 * npad * npad * mm_bytes                 # adj block
             + 2 * npad * dpad_in * mm_bytes            # x0 block
             + 2 * npad * 4                             # denom_inv block
             + 2 * npad * dpad_mem * 4                  # out block
             + 6 * npad * max(dpad_in, dpad_mem) * 4)   # in-kernel temporaries (x, ax, s, proj)
    fixed = (dpad_in * dpad_mem * mm_bytes
             + max(L - 1, 1) * dpad_mem * dpad_mem * mm_bytes
             + L * dpad_mem * 4
             + (2 << 20))                               # compiler scratch slack
    budget = _vmem_budget_bytes()

    bt = batch_block if batch_block is not None else _pick_bt(B, per_b, fixed, budget)
    bt = max(1, min(int(bt), B))
    bpad = _round_up(B, bt)
    vmem_limit = int(min(budget, max(fixed + 2 * bt * per_b, 32 * 1024 * 1024)))

    # Parameters: stack, zero-pad, pre-double bias, pre-cast to the MXU dtype on host
    # (no per-layer casts inside the kernel).
    w0_p = jnp.zeros((dpad_in, dpad_mem), mm_dtype)
    w0_p = w0_p.at[:weights[0].shape[0], :mem_dim].set(weights[0].astype(mm_dtype))
    wr_p = jnp.zeros((max(L - 1, 1), dpad_mem, dpad_mem), mm_dtype)
    b2_p = jnp.zeros((L, 1, dpad_mem), jnp.float32)
    b2_p = b2_p.at[0, 0, :mem_dim].set(2.0 * biases[0].astype(jnp.float32))
    for l in range(1, L):
        wr_p = wr_p.at[l - 1, :weights[l].shape[0], :mem_dim].set(weights[l].astype(mm_dtype))
        b2_p = b2_p.at[l, 0, :mem_dim].set(2.0 * biases[l].astype(jnp.float32))

    # Inputs already in the MXU dtype (halves adj/x0 DMA when bf16; {0,1} adj is exact in bf16).
    adj32 = adj.astype(jnp.float32)
    adj_p = jnp.zeros((bpad, npad, npad), mm_dtype).at[:B, :N, :N].set(adj32.astype(mm_dtype))
    x_p = jnp.zeros((bpad, npad, dpad_in), mm_dtype).at[:B, :N, :in_dim].set(
        gcn_inputs.astype(mm_dtype))
    dinv = 1.0 / (adj32.sum(axis=2, keepdims=True) + 1.0)               # exact, f32
    dinv_p = jnp.ones((bpad, npad, 1), jnp.float32).at[:B, :N].set(dinv)

    def call(single_buffer_params):
        pkw = {"pipeline_mode": pl.Buffered(1)} if single_buffer_params else {}
        in_specs = [
            pl.BlockSpec((bt, npad, npad), lambda i: (i, 0, 0)),            # adj chunk
            pl.BlockSpec((bt, npad, 1), lambda i: (i, 0, 0)),               # denom_inv chunk
            pl.BlockSpec((bt, npad, dpad_in), lambda i: (i, 0, 0)),         # x0 chunk
            pl.BlockSpec((dpad_in, dpad_mem), lambda i: (0, 0), **pkw),     # layer-0 weight (shared)
            pl.BlockSpec((max(L - 1, 1), dpad_mem, dpad_mem),
                         lambda i: (0, 0, 0), **pkw),                       # layers 1..L-1 weights
            pl.BlockSpec((L, 1, dpad_mem), lambda i: (0, 0, 0), **pkw),     # 2*biases (shared)
        ]
        return pl.pallas_call(
            _gcn_fused_kernel,
            out_shape=jax.ShapeDtypeStruct((bpad, npad, dpad_mem), jnp.float32),
            grid=(bpad // bt,),
            in_specs=in_specs,
            out_specs=pl.BlockSpec((bt, npad, dpad_mem), lambda i: (i, 0, 0)),
            compiler_params=pltpu.CompilerParams(
                # TODO(synk): try pltpu.CORE_PARALLEL on the batch axis for v7x (2 TCs/chip).
                dimension_semantics=("parallel",),
                vmem_limit_bytes=vmem_limit),
        )(adj_p, dinv_p, x_p, w0_p, wr_p, b2_p)

    try:
        out_p = call(True)    # weights/bias single-buffered: their block never changes
    except Exception:
        out_p = call(False)   # fall back to default double buffering if unsupported

    gcn_out = out_p[:B, :N, :mem_dim].astype(gcn_inputs.dtype)
    # masks = (adj.sum(2) + adj.sum(1)).eq(0).unsqueeze(2) -- cheap glue, kept in JAX
    masks = ((adj.sum(axis=2) + adj.sum(axis=1)) == 0)[..., None]
    return gcn_out, masks


def pad_sequence_jax(flat, seq_lens):
    """Equivalent of torch.split + pad_sequence(batch_first=True, padding_value=0)."""
    max_len = max(seq_lens)
    chunks = []
    off = 0
    for Lx in seq_lens:
        c = flat[off:off + Lx]
        c = jnp.pad(c, ((0, max_len - Lx), (0, 0)))
        chunks.append(c)
        off += Lx
    return jnp.stack(chunks, axis=0)


def _gcn_reference(adj, x, weights, biases):
    """Pure-JAX reference of the dense, non-GAT, eval-mode GCN_Layer forward."""
    denom = adj.sum(axis=2, keepdims=True) + 1.0
    for W, b in zip(weights, biases):
        ax = jnp.einsum('bij,bjd->bid', adj, x)
        x = jax.nn.relu((ax @ W + b + x @ W + b) / denom)
    masks = ((adj.sum(axis=2) + adj.sum(axis=1)) == 0)[..., None]
    return x, masks


if __name__ == "__main__":
    key = jax.random.PRNGKey(0)

    # Small, module-consistent shapes.
    word_dim, type_dim = 24, 8
    in_dim = word_dim + type_dim          # contextgcn=False -> in_dim = word_dim + type_dim
    mem_dim = 32
    num_layers = 2
    seq_lens = [16, 12]                   # per-document lengths
    B = len(seq_lens)
    N = max(seq_lens)

    keys = jax.random.split(key, 2 + 2 * num_layers)

    # Flat (un-padded) token embeddings, as the module receives them when contextgcn=False.
    flat_emb = jax.random.normal(keys[0], (sum(seq_lens), in_dim), dtype=jnp.float32)

    # Dense {0,1} adjacency, zeroed on padded positions.
    adj_raw = (jax.random.uniform(keys[1], (B, N, N)) > 0.7).astype(jnp.float32)
    valid = (jnp.arange(N)[None, :] < jnp.asarray(seq_lens)[:, None]).astype(jnp.float32)
    adj = adj_raw * valid[:, :, None] * valid[:, None, :]

    # Deterministic Linear parameters (uniform(-1/sqrt(fan_in), 1/sqrt(fan_in)), like torch).
    weights, biases = [], []
    for l in range(num_layers):
        din = in_dim if l == 0 else mem_dim
        bound = 1.0 / (din ** 0.5)
        wkey, bkey = keys[2 + 2 * l], keys[3 + 2 * l]
        # Stored as (din, mem_dim) == torch Linear weight transposed.
        weights.append(jax.random.uniform(wkey, (din, mem_dim), jnp.float32, -bound, bound))
        biases.append(jax.random.uniform(bkey, (mem_dim,), jnp.float32, -bound, bound))

    # contextgcn=False path: split + pad_sequence, in_drop is identity (eval mode).
    gcn_inputs = pad_sequence_jax(flat_emb, seq_lens)   # (B, N, in_dim)

    ref, ref_masks = _gcn_reference(adj, gcn_inputs, weights, biases)

    # Default path: bf16 MXU inputs, f32 accumulation, exact degree normalisation.
    out, masks = gcn_forward(adj, gcn_inputs, weights, biases)
    jax.block_until_ready(out)
    jax.block_until_ready(masks)
    assert out.shape == (B, N, mem_dim)
    assert masks.shape == (B, N, 1)
    assert bool(jnp.all(masks == ref_masks))
    err_bf16 = float(jnp.max(jnp.abs(out - ref)))
    assert bool(jnp.allclose(out, ref, rtol=2e-2, atol=2e-2)), err_bf16

    # f32 MXU path (tighter tolerance; denom is exact in both paths now).
    out32, masks32 = gcn_forward(adj, gcn_inputs, weights, biases, use_bf16=False)
    jax.block_until_ready(out32)
    err_f32 = float(jnp.max(jnp.abs(out32 - ref)))
    assert bool(jnp.allclose(out32, ref, rtol=1e-2, atol=1e-2)), err_f32
    assert bool(jnp.all(masks32 == ref_masks))

    print("KERNEL_OK")
</pallas_src>

<mosaic_0001>
module attributes {stable_mosaic.version = 11 : i64} {
  func.func @_gcn_fused_kernel(%arg0: i32, %arg1: memref<1x16x16xbf16, #tpu.memory_space<vmem>>, %arg2: memref<1x16x1xf32, #tpu.memory_space<vmem>>, %arg3: memref<1x16x128xbf16, #tpu.memory_space<vmem>>, %arg4: memref<128x128xbf16, #tpu.memory_space<vmem>>, %arg5: memref<1x128x128xbf16, #tpu.memory_space<vmem>>, %arg6: memref<2x1x128xf32, #tpu.memory_space<vmem>>, %arg7: memref<1x16x128xf32, #tpu.memory_space<vmem>>) attributes {dimension_semantics = [#tpu.dimension_semantics<parallel>], iteration_bounds = array<i64: 2>, scalar_prefetch = 0 : i64, scratch_operands = 0 : i64, tpu.core_type = #tpu.core_type<tc>, window_params = [{transform_indices = @transform_0, window_bounds = array<i64: 1, 16, 16>}, {transform_indices = @transform_1, window_bounds = array<i64: 1, 16, 1>}, {transform_indices = @transform_2, window_bounds = array<i64: 1, 16, 128>}, {pipeline_mode = #tpu.pipeline_mode<synchronous>, transform_indices = @transform_3, window_bounds = array<i64: 128, 128>}, {pipeline_mode = #tpu.pipeline_mode<synchronous>, transform_indices = @transform_4, window_bounds = array<i64: 1, 128, 128>}, {pipeline_mode = #tpu.pipeline_mode<synchronous>, transform_indices = @transform_5, window_bounds = array<i64: 2, 1, 128>}, {transform_indices = @transform_6, window_bounds = array<i64: 1, 16, 128>}]} {
    %c0 = arith.constant 0 : index
    %c0_0 = arith.constant 0 : index
    %c0_1 = arith.constant 0 : index
    %0 = vector.load %arg1[%c0, %c0_0, %c0_1] : memref<1x16x16xbf16, #tpu.memory_space<vmem>>, vector<1x16x16xbf16>
    %c0_2 = arith.constant 0 : index
    %c0_3 = arith.constant 0 : index
    %c0_4 = arith.constant 0 : index
    %1 = vector.load %arg2[%c0_2, %c0_3, %c0_4] : memref<1x16x1xf32, #tpu.memory_space<vmem>>, vector<1x16x1xf32>
    %c0_5 = arith.constant 0 : index
    %c0_6 = arith.constant 0 : index
    %c0_7 = arith.constant 0 : index
    %2 = vector.load %arg3[%c0_5, %c0_6, %c0_7] : memref<1x16x128xbf16, #tpu.memory_space<vmem>>, vector<1x16x128xbf16>
    %3 = arith.extf %2 : vector<1x16x128xbf16> to vector<1x16x128xf32>
    %c0_8 = arith.constant 0 : index
    %c0_9 = arith.constant 0 : index
    %4 = vector.load %arg4[%c0_8, %c0_9] : memref<128x128xbf16, #tpu.memory_space<vmem>>, vector<128x128xbf16>
    %c0_10 = arith.constant 0 : index
    %c0_11 = arith.constant 0 : index
    %c0_12 = arith.constant 0 : index
    %5 = vector.load %arg6[%c0_10, %c0_11, %c0_12] : memref<2x1x128xf32, #tpu.memory_space<vmem>>, vector<1x1x128xf32>
    %6 = vector.shape_cast %5 : vector<1x1x128xf32> to vector<1x128xf32>
    "tpu.trace_start"() <{level = 10 : i32, message = "bij,bjd->bid"}> : () -> ()
    %cst = arith.constant dense<0.000000e+00> : vector<1x16x128xf32>
    %7 = tpu.matmul %0, %2, %cst {dimension_numbers = #tpu.dot_dimension_numbers<[2], [1], [1], [2], [0, 0, 0, 1, 1, 2], [0], [0]>} : vector<1x16x16xbf16>, vector<1x16x128xbf16>, vector<1x16x128xf32> -> vector<1x16x128xf32>
    "tpu.trace_stop"() : () -> ()
    %8 = arith.addf %7, %3 : vector<1x16x128xf32>
    %9 = vector.shape_cast %8 : vector<1x16x128xf32> to vector<16x128xf32>
    %10 = arith.truncf %9 : vector<16x128xf32> to vector<16x128xbf16>
    %cst_13 = arith.constant dense<0.000000e+00> : vector<16x128xf32>
    %11 = tpu.matmul %10, %4, %cst_13 {dimension_numbers = #tpu.dot_dimension_numbers<[1], [0], [0], [1], [0, 0, 1, 1], [], []>} : vector<16x128xbf16>, vector<128x128xbf16>, vector<16x128xf32> -> vector<16x128xf32>
    %12 = vector.broadcast %6 : vector<1x128xf32> to vector<16x128xf32>
    %13 = arith.addf %11, %12 : vector<16x128xf32>
    %14 = vector.shape_cast %13 : vector<16x128xf32> to vector<1x16x128xf32>
    %15 = vector.broadcast %1 : vector<1x16x1xf32> to vector<1x16x128xf32>
    %16 = arith.mulf %14, %15 : vector<1x16x128xf32>
    %cst_14 = arith.constant 0.000000e+00 : f32
    %17 = vector.broadcast %cst_14 : f32 to vector<1x16x128xf32>
    %18 = arith.maximumf %16, %17 : vector<1x16x128xf32>
    %19 = arith.truncf %18 : vector<1x16x128xf32> to vector<1x16x128xbf16>
    %c0_15 = arith.constant 0 : index
    %c0_16 = arith.constant 0 : index
    %c0_17 = arith.constant 0 : index
    %20 = vector.load %arg5[%c0_15, %c0_16, %c0_17] : memref<1x128x128xbf16, #tpu.memory_space<vmem>>, vector<1x128x128xbf16>
    %21 = vector.shape_cast %20 : vector<1x128x128xbf16> to vector<128x128xbf16>
    %c1 = arith.constant 1 : index
    %c0_18 = arith.constant 0 : index
    %c0_19 = arith.constant 0 : index
    %22 = vector.load %arg6[%c1, %c0_18, %c0_19] : memref<2x1x128xf32, #tpu.memory_space<vmem>>, vector<1x1x128xf32>
    %23 = vector.shape_cast %22 : vector<1x1x128xf32> to vector<1x128xf32>
    "tpu.trace_start"() <{level = 10 : i32, message = "bij,bjd->bid"}> : () -> ()
    %cst_20 = arith.constant dense<0.000000e+00> : vector<1x16x128xf32>
    %24 = tpu.matmul %0, %19, %cst_20 {dimension_numbers = #tpu.dot_dimension_numbers<[2], [1], [1], [2], [0, 0, 0, 1, 1, 2], [0], [0]>} : vector<1x16x16xbf16>, vector<1x16x128xbf16>, vector<1x16x128xf32> -> vector<1x16x128xf32>
    "tpu.trace_stop"() : () -> ()
    %25 = arith.addf %24, %18 : vector<1x16x128xf32>
    %26 = vector.shape_cast %25 : vector<1x16x128xf32> to vector<16x128xf32>
    %27 = arith.truncf %26 : vector<16x128xf32> to vector<16x128xbf16>
    %cst_21 = arith.constant dense<0.000000e+00> : vector<16x128xf32>
    %28 = tpu.matmul %27, %21, %cst_21 {dimension_numbers = #tpu.dot_dimension_numbers<[1], [0], [0], [1], [0, 0, 1, 1], [], []>} : vector<16x128xbf16>, vector<128x128xbf16>, vector<16x128xf32> -> vector<16x128xf32>
    %29 = vector.broadcast %23 : vector<1x128xf32> to vector<16x128xf32>
    %30 = arith.addf %28, %29 : vector<16x128xf32>
    %31 = vector.shape_cast %30 : vector<16x128xf32> to vector<1x16x128xf32>
    %32 = vector.broadcast %1 : vector<1x16x1xf32> to vector<1x16x128xf32>
    %33 = arith.mulf %31, %32 : vector<1x16x128xf32>
    %cst_22 = arith.constant 0.000000e+00 : f32
    %34 = vector.broadcast %cst_22 : f32 to vector<1x16x128xf32>
    %35 = arith.maximumf %33, %34 : vector<1x16x128xf32>
    %c0_23 = arith.constant 0 : index
    %c0_24 = arith.constant 0 : index
    %c0_25 = arith.constant 0 : index
    %36 = vector.load %arg7[%c0_23, %c0_24, %c0_25] : memref<1x16x128xf32, #tpu.memory_space<vmem>>, vector<1x16x128xf32>
    tpu.vector_store %arg7[%c0_23, %c0_24, %c0_25], %35 {strides = array<i32>} : memref<1x16x128xf32, #tpu.memory_space<vmem>>, vector<1x16x128xf32>,
    return
  }
  func.func @transform_0(%arg0: i32) -> (i32, i32, i32) {
    %c0_i32 = arith.constant 0 : i32
    %c0_i32_0 = arith.constant 0 : i32
    %c0_i32_1 = arith.constant 0 : i32
    return %arg0, %c0_i32, %c0_i32_0 : i32, i32, i32
  }
  func.func @transform_1(%arg0: i32) -> (i32, i32, i32) {
    %c0_i32 = arith.constant 0 : i32
    %c0_i32_0 = arith.constant 0 : i32
    %c0_i32_1 = arith.constant 0 : i32
    return %arg0, %c0_i32, %c0_i32_0 : i32, i32, i32
  }
  func.func @transform_2(%arg0: i32) -> (i32, i32, i32) {
    %c0_i32 = arith.constant 0 : i32
    %c0_i32_0 = arith.constant 0 : i32
    %c0_i32_1 = arith.constant 0 : i32
    return %arg0, %c0_i32, %c0_i32_0 : i32, i32, i32
  }
  func.func @transform_3(%arg0: i32) -> (i32, i32) {
    %c0_i32 = arith.constant 0 : i32
    %c0_i32_0 = arith.constant 0 : i32
    %c0_i32_1 = arith.constant 0 : i32
    return %c0_i32, %c0_i32_0 : i32, i32
  }
  func.func @transform_4(%arg0: i32) -> (i32, i32, i32) {
    %c0_i32 = arith.constant 0 : i32
    %c0_i32_0 = arith.constant 0 : i32
    %c0_i32_1 = arith.constant 0 : i32
    %c0_i32_2 = arith.constant 0 : i32
    return %c0_i32, %c0_i32_0, %c0_i32_1 : i32, i32, i32
  }
  func.func @transform_5(%arg0: i32) -> (i32, i32, i32) {
    %c0_i32 = arith.constant 0 : i32
    %c0_i32_0 = arith.constant 0 : i32
    %c0_i32_1 = arith.constant 0 : i32
    %c0_i32_2 = arith.constant 0 : i32
    return %c0_i32, %c0_i32_0, %c0_i32_1 : i32, i32, i32
  }
  func.func @transform_6(%arg0: i32) -> (i32, i32, i32) {
    %c0_i32 = arith.constant 0 : i32
    %c0_i32_0 = arith.constant 0 : i32
    %c0_i32_1 = arith.constant 0 : i32
    return %arg0, %c0_i32, %c0_i32_0 : i32, i32, i32
  }
}

module attributes {stable_mosaic.version = 11 : i64} {
  func.func @_gcn_fused_kernel(%arg0: i32, %arg1: memref<1x16x16xbf16, #tpu.memory_space<vmem>>, %arg2: memref<1x16x1xf32, #tpu.memory_space<vmem>>, %arg3: memref<1x16x128xbf16, #tpu.memory_space<vmem>>, %arg4: memref<128x128xbf16, #tpu.memory_space<vmem>>, %arg5: memref<1x128x128xbf16, #tpu.memory_space<vmem>>, %arg6: memref<2x1x128xf32, #tpu.memory_space<vmem>>, %arg7: memref<1x16x128xf32, #tpu.memory_space<vmem>>) attributes {dimension_semantics = [#tpu.dimension_semantics<parallel>], iteration_bounds = array<i64: 2>, scalar_prefetch = 0 : i64, scratch_operands = 0 : i64, tpu.core_type = #tpu.core_type<tc>, window_params = [{transform_indices = @transform_0, window_bounds = array<i64: 1, 16, 16>}, {transform_indices = @transform_1, window_bounds = array<i64: 1, 16, 1>}, {transform_indices = @transform_2, window_bounds = array<i64: 1, 16, 128>}, {pipeline_mode = #tpu.pipeline_mode<synchronous>, transform_indices = @transform_3, window_bounds = array<i64: 128, 128>}, {pipeline_mode = #tpu.pipeline_mode<synchronous>, transform_indices = @transform_4, window_bounds = array<i64: 1, 128, 128>}, {pipeline_mode = #tpu.pipeline_mode<synchronous>, transform_indices = @transform_5, window_bounds = array<i64: 2, 1, 128>}, {transform_indices = @transform_6, window_bounds = array<i64: 1, 16, 128>}]} {
    %c0 = arith.constant 0 : index
    %c0_0 = arith.constant 0 : index
    %c0_1 = arith.constant 0 : index
    %0 = vector.load %arg1[%c0, %c0_0, %c0_1] : memref<1x16x16xbf16, #tpu.memory_space<vmem>>, vector<1x16x16xbf16>
    %c0_2 = arith.constant 0 : index
    %c0_3 = arith.constant 0 : index
    %c0_4 = arith.constant 0 : index
    %1 = vector.load %arg2[%c0_2, %c0_3, %c0_4] : memref<1x16x1xf32, #tpu.memory_space<vmem>>, vector<1x16x1xf32>
    %c0_5 = arith.constant 0 : index
    %c0_6 = arith.constant 0 : index
    %c0_7 = arith.constant 0 : index
    %2 = vector.load %arg3[%c0_5, %c0_6, %c0_7] : memref<1x16x128xbf16, #tpu.memory_space<vmem>>, vector<1x16x128xbf16>
    %3 = arith.extf %2 : vector<1x16x128xbf16> to vector<1x16x128xf32>
    %c0_8 = arith.constant 0 : index
    %c0_9 = arith.constant 0 : index
    %4 = vector.load %arg4[%c0_8, %c0_9] : memref<128x128xbf16, #tpu.memory_space<vmem>>, vector<128x128xbf16>
    %c0_10 = arith.constant 0 : index
    %c0_11 = arith.constant 0 : index
    %c0_12 = arith.constant 0 : index
    %5 = vector.load %arg6[%c0_10, %c0_11, %c0_12] : memref<2x1x128xf32, #tpu.memory_space<vmem>>, vector<1x1x128xf32>
    %6 = vector.shape_cast %5 : vector<1x1x128xf32> to vector<1x128xf32>
    "tpu.trace_start"() <{level = 10 : i32, message = "bij,bjd->bid"}> : () -> ()
    %cst = arith.constant dense<0.000000e+00> : vector<1x16x128xf32>
    %7 = tpu.matmul %0, %2, %cst {dimension_numbers = #tpu.dot_dimension_numbers<[2], [1], [1], [2], [0, 0, 0, 1, 1, 2], [0], [0]>} : vector<1x16x16xbf16>, vector<1x16x128xbf16>, vector<1x16x128xf32> -> vector<1x16x128xf32>
    "tpu.trace_stop"() : () -> ()
    %8 = arith.addf %7, %3 : vector<1x16x128xf32>
    %9 = vector.shape_cast %8 : vector<1x16x128xf32> to vector<16x128xf32>
    %10 = arith.truncf %9 : vector<16x128xf32> to vector<16x128xbf16>
    %cst_13 = arith.constant dense<0.000000e+00> : vector<16x128xf32>
    %11 = tpu.matmul %10, %4, %cst_13 {dimension_numbers = #tpu.dot_dimension_numbers<[1], [0], [0], [1], [0, 0, 1, 1], [], []>} : vector<16x128xbf16>, vector<128x128xbf16>, vector<16x128xf32> -> vector<16x128xf32>
    %12 = vector.broadcast %6 : vector<1x128xf32> to vector<16x128xf32>
    %13 = arith.addf %11, %12 : vector<16x128xf32>
    %14 = vector.shape_cast %13 : vector<16x128xf32> to vector<1x16x128xf32>
    %15 = vector.broadcast %1 : vector<1x16x1xf32> to vector<1x16x128xf32>
    %16 = arith.mulf %14, %15 : vector<1x16x128xf32>
    %cst_14 = arith.constant 0.000000e+00 : f32
    %17 = vector.broadcast %cst_14 : f32 to vector<1x16x128xf32>
    %18 = arith.maximumf %16, %17 : vector<1x16x128xf32>
    %19 = arith.truncf %18 : vector<1x16x128xf32> to vector<1x16x128xbf16>
    %c0_15 = arith.constant 0 : index
    %c0_16 = arith.constant 0 : index
    %c0_17 = arith.constant 0 : index
    %20 = vector.load %arg5[%c0_15, %c0_16, %c0_17] : memref<1x128x128xbf16, #tpu.memory_space<vmem>>, vector<1x128x128xbf16>
    %21 = vector.shape_cast %20 : vector<1x128x128xbf16> to vector<128x128xbf16>
    %c1 = arith.constant 1 : index
    %c0_18 = arith.constant 0 : index
    %c0_19 = arith.constant 0 : index
    %22 = vector.load %arg6[%c1, %c0_18, %c0_19] : memref<2x1x128xf32, #tpu.memory_space<vmem>>, vector<1x1x128xf32>
    %23 = vector.shape_cast %22 : vector<1x1x128xf32> to vector<1x128xf32>
    "tpu.trace_start"() <{level = 10 : i32, message = "bij,bjd->bid"}> : () -> ()
    %cst_20 = arith.constant dense<0.000000e+00> : vector<1x16x128xf32>
    %24 = tpu.matmul %0, %19, %cst_20 {dimension_numbers = #tpu.dot_dimension_numbers<[2], [1], [1], [2], [0, 0, 0, 1, 1, 2], [0], [0]>} : vector<1x16x16xbf16>, vector<1x16x128xbf16>, vector<1x16x128xf32> -> vector<1x16x128xf32>
    "tpu.trace_stop"() : () -> ()
    %25 = arith.addf %24, %18 : vector<1x16x128xf32>
    %26 = vector.shape_cast %25 : vector<1x16x128xf32> to vector<16x128xf32>
    %27 = arith.truncf %26 : vector<16x128xf32> to vector<16x128xbf16>
    %cst_21 = arith.constant dense<0.000000e+00> : vector<16x128xf32>
    %28 = tpu.matmul %27, %21, %cst_21 {dimension_numbers = #tpu.dot_dimension_numbers<[1], [0], [0], [1], [0, 0, 1, 1], [], []>} : vector<16x128xbf16>, vector<128x128xbf16>, vector<16x128xf32> -> vector<16x128xf32>
    %29 = vector.broadcast %23 : vector<1x128xf32> to vector<16x128xf32>
    %30 = arith.addf %28, %29 : vector<16x128xf32>
    %31 = vector.shape_cast %30 : vector<16x128xf32> to vector<1x16x128xf32>
    %32 = vector.broadcast %1 : vector<1x16x1xf32> to vector<1x16x128xf32>
    %33 = arith.mulf %31, %32 : vector<1x16x128xf32>
    %cst_22 = arith.constant 0.000000e+00 : f32
    %34 = vector.broadcast %cst_22 : f32 to vector<1x16x128xf32>
    %35 = arith.maximumf %33, %34 : vector<1x16x128xf32>
    %c0_23 = arith.constant 0 : index
    %c0_24 = arith.constant 0 : index
    %c0_25 = arith.constant 0 : index
    %36 = vector.load %arg7[%c0_23, %c0_24, %c0_25] : memref<1x16x128xf32, #tpu.memory_space<vmem>>, vector<1x16x128xf32>
    tpu.vector_store %arg7[%c0_23, %c0_24, %c0_25], %35 {strides = array<i32>} : memref<1x16x128xf32, #tpu.memory_space<vmem>>, vector<1x16x128xf32>,
    return
  }
  func.func @transform_0(%arg0: i32) -> (i32, i32, i32) {
    %c0_i32 = arith.constant 0 : i32
    %c0_i32_0 = arith.constant 0 : i32
    %c0_i32_1 = arith.constant 0 : i32
    return %arg0, %c0_i32, %c0_i32_0 : i32, i32, i32
  }
  func.func @transform_1(%arg0: i32) -> (i32, i32, i32) {
    %c0_i32 = arith.constant 0 : i32
    %c0_i32_0 = arith.constant 0 : i32
    %c0_i32_1 = arith.constant 0 : i32
    return %arg0, %c0_i32, %c0_i32_0 : i32, i32, i32
  }
  func.func @transform_2(%arg0: i32) -> (i32, i32, i32) {
    %c0_i32 = arith.constant 0 : i32
    %c0_i32_0 = arith.constant 0 : i32
    %c0_i32_1 = arith.constant 0 : i32
    return %arg0, %c0_i32, %c0_i32_0 : i32, i32, i32
  }
  func.func @transform_3(%arg0: i32) -> (i32, i32) {
    %c0_i32 = arith.constant 0 : i32
    %c0_i32_0 = arith.constant 0 : i32
    %c0_i32_1 = arith.constant 0 : i32
    return %c0_i32, %c0_i32_0 : i32, i32
  }
  func.func @transform_4(%arg0: i32) -> (i32, i32, i32) {
    %c0_i32 = arith.constant 0 : i32
    %c0_i32_0 = arith.constant 0 : i32
    %c0_i32_1 = arith.constant 0 : i32
    %c0_i32_2 = arith.constant 0 : i32
    return %c0_i32, %c0_i32_0, %c0_i32_1 : i32, i32, i32
  }
  func.func @transform_5(%arg0: i32) -> (i32, i32, i32) {
    %c0_i32 = arith.constant 0 : i32
    %c0_i32_0 = arith.constant 0 : i32
    %c0_i32_1 = arith.constant 0 : i32
    %c0_i32_2 = arith.constant 0 : i32
    return %c0_i32, %c0_i32_0, %c0_i32_1 : i32, i32, i32
  }
  func.func @transform_6(%arg0: i32) -> (i32, i32, i32) {
    %c0_i32 = arith.constant 0 : i32
    %c0_i32_0 = arith.constant 0 : i32
    %c0_i32_1 = arith.constant 0 : i32
    return %arg0, %c0_i32, %c0_i32_0 : i32, i32, i32
  }
}

</mosaic_0001>

<llo_original>
// kernel: tpu_custom_call.1
$region0: #{tpu_custom_call.1}
  #allocation0 [shape = 'u32[]', space=smem, size = 0x4, offset = 0x4, fixed_abs, tag = 'smem constant byte address 0x4 - core index']
  #allocation1 [shape = 'u32[144,128]{1,0:T(1,128)}', space=vmem, size = 0x12000, scoped, tag = 'internal scratch']
  %s0 = inlined_call_operand.vmem [shape: bf16[2,16,16], index: 0, kind: input, shape index: {}]
  %s1 = inlined_call_operand.vmem [shape: f32[2,16,1], index: 1, kind: input, shape index: {}]
  %s2 = inlined_call_operand.vmem [shape: bf16[2,16,128], index: 2, kind: input, shape index: {}]
  %s3 = inlined_call_operand.hbm [shape: bf16[128,128], index: 3, kind: input, shape index: {}]
  %s4 = inlined_call_operand.hbm [shape: bf16[1,128,128], index: 4, kind: input, shape index: {}]
  %s5 = inlined_call_operand.vmem [shape: f32[2,1,128], index: 5, kind: input, shape index: {}]
  %s6 = inlined_call_operand.hbm [shape: f32[2,16,128], index: 6, kind: output, shape index: {}]
  %s7 = sld [smem:[#allocation0]]
  $region65: #{tpu_custom_call.1} parent=0
    _
  %s9 = ssub.s32 1, %s7
  %s10 = scalar_select 0, %s9, %s7
  $region1: #{tpu_custom_call.1} parent=0
    #allocation2 [shape = 'u8[32768]{0}', space=vmem, size = 0x8000, scoped, tag = 'input window, operand 3, single buffered']
    #allocation3 [shape = 's32[2]{0}', space=sflag, size = 0x8, scoped, tag = 'scoped memory for tpu_custom_call.1']
    #allocation4 [shape = 's32[2]{0}', space=sflag, size = 0x8, scoped, tag = 'scoped memory for tpu_custom_call.1']
    #allocation5 [shape = 'u8[32768]{0}', space=vmem, size = 0x8000, scoped, tag = 'input window, operand 4, single buffered']
    #allocation6 [shape = 's32[1]{0}', space=sflag, size = 0x4, scoped, tag = 'scoped memory for tpu_custom_call.1']
    #allocation7 [shape = 'u8[16384]{0}', space=vmem, size = 0x4000, scoped, tag = 'output window, operand 0']
    %11 = vsyncpa [#allocation3], 0
    %12 = vsyncpa [#allocation6], 0
    %13 = vsyncpa [#allocation4], 0
    %s14 = scalar_lea.sflag [#allocation4], 1
    %15 = vsyncpa %s14, 0
    loop: start=0, step=1, limit=4
    $region2: #{tpu_custom_call.1} parent=1 // loop_pre_header
      _
    $region3: #{tpu_custom_call.1} parent=1 // loop_header
      %s17 = sphi 0, %s21
      %p18 = scmp.ge.s32.totalorder %s17, 4
      %s27 = sphi 0, %s29
      %s30 = sphi 0, %s27
      %s31 = sphi 0, %s30
      %s47 = sphi 0, %s31
      %s53 = sphi 0, %s55
      %s56 = sphi 0, %s53
      %s57 = sphi 0, %s56
      %s73 = sphi 0, %s57
      %s79 = sphi 0, %s81
      %s82 = sphi 0, %s79
      %s83 = sphi 0, %s82
      %s99 = sphi 0, %s83
      %s103 = sphi 0, %s103
      %s105 = sphi 0, %s103
      %s106 = sphi 0, %s105
      %s120 = sphi 0, %s106
      %s124 = sphi 0, %s124
      %s126 = sphi 0, %s124
      %s127 = sphi 0, %s126
      %s141 = sphi 0, %s127
      %s145 = sphi 0, %s145
      %s147 = sphi 0, %s145
      %s148 = sphi 0, %s147
      %s162 = sphi 0, %s148
      %s168 = sphi 0, %s170
      %s171 = sphi 0, %s168
      %s172 = sphi 0, %s171
      %s188 = sphi 0, %s172
    $region4: #{tpu_custom_call.1} parent=1 // loop_header_branch
      %20 = sbr.rel (%p18) target = $region8
    $region5: #{tpu_custom_call.1} parent=1 // loop_body
      %s22 = ssub.s32 %s17, 1
      %s23 = ssub.s32 %s17, 2
      %s24 = sadd.s32 %s17, 1
      %s25 = ssub.s32 %s17, %s24
      %p26 = scmp.eq.s32.totalorder %s25, 0
      %s28 = sadd.s32 %s27, 1
      %s29 = scalar_select %p26, %s27, %s28
      %p32 = pneg %p26
      %p33 = scmp.eq.s32.totalorder %s17, 1
      %p34 = por %p32, %p33
      %p35 = scmp.ne.s32.totalorder %s27, %s30
      %p36 = scmp.eq.s32.totalorder %s17, 0
      %p37 = por %p35, %p36
      %p38 = scmp.ne.s32.totalorder %s27, %s30
      %p39 = scmp.eq.s32.totalorder %s22, 1
      %p40 = por %p38, %p39
      %p41 = scmp.ne.s32.totalorder %s30, %s31
      %p42 = scmp.eq.s32.totalorder %s22, 0
      %p43 = por %p41, %p42
      %p44 = scmp.ne.s32.totalorder %s30, %s31
      %p45 = scmp.eq.s32.totalorder %s23, 1
      %p46 = por %p44, %p45
      %p48 = scmp.ne.s32.totalorder %s31, %s47
      %p49 = scmp.eq.s32.totalorder %s23, 0
      %p50 = por %p48, %p49
      %s51 = ssub.s32 %s17, %s24
      %p52 = scmp.eq.s32.totalorder %s51, 0
      %s54 = sadd.s32 %s53, 1
      %s55 = scalar_select %p52, %s53, %s54
      %p58 = pneg %p52
      %p59 = scmp.eq.s32.totalorder %s17, 1
      %p60 = por %p58, %p59
      %p61 = scmp.ne.s32.totalorder %s53, %s56
      %p62 = scmp.eq.s32.totalorder %s17, 0
      %p63 = por %p61, %p62
      %p64 = scmp.ne.s32.totalorder %s53, %s56
      %p65 = scmp.eq.s32.totalorder %s22, 1
      %p66 = por %p64, %p65
      %p67 = scmp.ne.s32.totalorder %s56, %s57
      %p68 = scmp.eq.s32.totalorder %s22, 0
      %p69 = por %p67, %p68
      %p70 = scmp.ne.s32.totalorder %s56, %s57
      %p71 = scmp.eq.s32.totalorder %s23, 1
      %p72 = por %p70, %p71
      %p74 = scmp.ne.s32.totalorder %s57, %s73
      %p75 = scmp.eq.s32.totalorder %s23, 0
      %p76 = por %p74, %p75
      %s77 = ssub.s32 %s17, %s24
      %p78 = scmp.eq.s32.totalorder %s77, 0
      %s80 = sadd.s32 %s79, 1
      %s81 = scalar_select %p78, %s79, %s80
      %p84 = pneg %p78
      %p85 = scmp.eq.s32.totalorder %s17, 1
      %p86 = por %p84, %p85
      %p87 = scmp.ne.s32.totalorder %s79, %s82
      %p88 = scmp.eq.s32.totalorder %s17, 0
      %p89 = por %p87, %p88
      %p90 = scmp.ne.s32.totalorder %s79, %s82
      %p91 = scmp.eq.s32.totalorder %s22, 1
      %p92 = por %p90, %p91
      %p93 = scmp.ne.s32.totalorder %s82, %s83
      %p94 = scmp.eq.s32.totalorder %s22, 0
      %p95 = por %p93, %p94
      %p96 = scmp.ne.s32.totalorder %s82, %s83
      %p97 = scmp.eq.s32.totalorder %s23, 1
      %p98 = por %p96, %p97
      %p100 = scmp.ne.s32.totalorder %s83, %s99
      %p101 = scmp.eq.s32.totalorder %s23, 0
      %p102 = por %p100, %p101
      %s104 = sadd.s32 %s103, 1
      %p107 = scmp.eq.s32.totalorder %s17, 1
      %p108 = scmp.ne.s32.totalorder %s103, %s105
      %p109 = scmp.eq.s32.totalorder %s17, 0
      %p110 = por %p108, %p109
      %p111 = scmp.ne.s32.totalorder %s103, %s105
      %p112 = scmp.eq.s32.totalorder %s22, 1
      %p113 = por %p111, %p112
      %p114 = scmp.ne.s32.totalorder %s105, %s106
      %p115 = scmp.eq.s32.totalorder %s22, 0
      %p116 = por %p114, %p115
      %p117 = scmp.ne.s32.totalorder %s105, %s106
      %p118 = scmp.eq.s32.totalorder %s23, 1
      %p119 = por %p117, %p118
      %p121 = scmp.ne.s32.totalorder %s106, %s120
      %p122 = scmp.eq.s32.totalorder %s23, 0
      %p123 = por %p121, %p122
      %s125 = sadd.s32 %s124, 1
      %p128 = scmp.eq.s32.totalorder %s17, 1
      %p129 = scmp.ne.s32.totalorder %s124, %s126
      %p130 = scmp.eq.s32.totalorder %s17, 0
      %p131 = por %p129, %p130
      %p132 = scmp.ne.s32.totalorder %s124, %s126
      %p133 = scmp.eq.s32.totalorder %s22, 1
      %p134 = por %p132, %p133
      %p135 = scmp.ne.s32.totalorder %s126, %s127
      %p136 = scmp.eq.s32.totalorder %s22, 0
      %p137 = por %p135, %p136
      %p138 = scmp.ne.s32.totalorder %s126, %s127
      %p139 = scmp.eq.s32.totalorder %s23, 1
      %p140 = por %p138, %p139
      %p142 = scmp.ne.s32.totalorder %s127, %s141
      %p143 = scmp.eq.s32.totalorder %s23, 0
      %p144 = por %p142, %p143
      %s146 = sadd.s32 %s145, 1
      %p149 = scmp.eq.s32.totalorder %s17, 1
      %p150 = scmp.ne.s32.totalorder %s145, %s147
      %p151 = scmp.eq.s32.totalorder %s17, 0
      %p152 = por %p150, %p151
      %p153 = scmp.ne.s32.totalorder %s145, %s147
      %p154 = scmp.eq.s32.totalorder %s22, 1
      %p155 = por %p153, %p154
      %p156 = scmp.ne.s32.totalorder %s147, %s148
      %p157 = scmp.eq.s32.totalorder %s22, 0
      %p158 = por %p156, %p157
      %p159 = scmp.ne.s32.totalorder %s147, %s148
      %p160 = scmp.eq.s32.totalorder %s23, 1
      %p161 = por %p159, %p160
      %p163 = scmp.ne.s32.totalorder %s148, %s162
      %p164 = scmp.eq.s32.totalorder %s23, 0
      %p165 = por %p163, %p164
      %s166 = ssub.s32 %s17, %s24
      %p167 = scmp.eq.s32.totalorder %s166, 0
      %s169 = sadd.s32 %s168, 1
      %s170 = scalar_select %p167, %s168, %s169
      %p173 = pneg %p167
      %p174 = scmp.eq.s32.totalorder %s17, 1
      %p175 = por %p173, %p174
      %p176 = scmp.ne.s32.totalorder %s168, %s171
      %p177 = scmp.eq.s32.totalorder %s17, 0
      %p178 = por %p176, %p177
      %p179 = scmp.ne.s32.totalorder %s168, %s171
      %p180 = scmp.eq.s32.totalorder %s22, 1
      %p181 = por %p179, %p180
      %p182 = scmp.ne.s32.totalorder %s171, %s172
      %p183 = scmp.eq.s32.totalorder %s22, 0
      %p184 = por %p182, %p183
      %p185 = scmp.ne.s32.totalorder %s171, %s172
      %p186 = scmp.eq.s32.totalorder %s23, 1
      %p187 = por %p185, %p186
      %p189 = scmp.ne.s32.totalorder %s172, %s188
      %p190 = scmp.eq.s32.totalorder %s23, 0
      %p191 = por %p189, %p190
      %p192 = scmp.le.s32.totalorder 1, %s17
      %p193 = scmp.lt.s32.totalorder %s17, 3
      %p194 = pnand %p192, %p193
      %p195 = pneg %p194
      // Predicated region
      $region9: #{tpu_custom_call.1} parent=5 // pred_check
        _
      $region10: #{tpu_custom_call.1} parent=5 // pred_check_branch
        %197 = sbr.rel (%p194) target = $region12
      $region11: #{tpu_custom_call.1} parent=5 // pred_region
        %s198 = ssub.s32 %s17, 1
        // Predicated region
        $region13: #{tpu_custom_call.1} parent=11 // pred_check
          %p199 = pneg %p116
        $region14: #{tpu_custom_call.1} parent=11 // pred_check_branch
          %201 = sbr.rel (%p199) target = $region16
        $region15: #{tpu_custom_call.1} parent=11 // pred_region
          %s203 = ssub.s32 1024, 1024
          %204 = vsyncadd [#allocation3], %s203
          %s205 = sshll.u32 [#allocation2], 4
          %s206 = int_to_ptr.vmem [resolvable:$true] %s205
          %211 = dma.hbm_to_vmem [thread:$0]  %s3, 1024, %s206, [#allocation3], 64, 64, 4
        $region16: #{tpu_custom_call.1} parent=11 // pred_fallthru
          _
        // Predicated region
        $region17: #{tpu_custom_call.1} parent=11 // pred_check
          %p212 = pneg %p137
        $region18: #{tpu_custom_call.1} parent=11 // pred_check_branch
          %214 = sbr.rel (%p212) target = $region20
        $region19: #{tpu_custom_call.1} parent=11 // pred_region
          %s216 = ssub.s32 1024, 1024
          %217 = vsyncadd [#allocation6], %s216
          %s218 = sshll.u32 [#allocation5], 4
          %s219 = int_to_ptr.vmem [resolvable:$true] %s218
          %224 = dma.hbm_to_vmem [thread:$0]  %s4, 1024, %s219, [#allocation6], 64, 64, 4
        $region20: #{tpu_custom_call.1} parent=11 // pred_fallthru
          _
        // Predicated region
        $region21: #{tpu_custom_call.1} parent=11 // pred_check
          %p225 = pneg %p158
        $region22: #{tpu_custom_call.1} parent=11 // pred_check_branch
          %227 = sbr.rel (%p225) target = $region24
        $region23: #{tpu_custom_call.1} parent=11 // pred_region
          _
        $region24: #{tpu_custom_call.1} parent=11 // pred_fallthru
          _
      $region12: #{tpu_custom_call.1} parent=5 // pred_fallthru
        _
      %p228 = scmp.lt.s32.totalorder %s17, 2
      // Predicated region
      $region25: #{tpu_custom_call.1} parent=5 // pred_check
        %p229 = pneg %p228
      $region26: #{tpu_custom_call.1} parent=5 // pred_check_branch
        %231 = sbr.rel (%p229) target = $region28
      $region27: #{tpu_custom_call.1} parent=5 // pred_region
        // Predicated region
        $region29: #{tpu_custom_call.1} parent=27 // pred_check
          %p232 = pneg %p37
        $region30: #{tpu_custom_call.1} parent=27 // pred_check_branch
          %234 = sbr.rel (%p232) target = $region32
        $region31: #{tpu_custom_call.1} parent=27 // pred_region
          %p235 = scmp.lt.s32.totalorder %s17, 1
          %s236 = scalar_select %p235, %s17, 1
          %s237 = smul.addr %s236, 2
          %s238 = smul.addr %s237, 4
          %s239 = scalar_lea.vmem %s0, %s238
        $region32: #{tpu_custom_call.1} parent=27 // pred_fallthru
          _
        // Predicated region
        $region33: #{tpu_custom_call.1} parent=27 // pred_check
          %p240 = pneg %p63
        $region34: #{tpu_custom_call.1} parent=27 // pred_check_branch
          %242 = sbr.rel (%p240) target = $region36
        $region35: #{tpu_custom_call.1} parent=27 // pred_region
          %p243 = scmp.lt.s32.totalorder %s17, 1
          %s244 = scalar_select %p243, %s17, 1
          %s245 = smul.addr %s244, 2
          %s246 = smul.addr %s245, 8
          %s247 = scalar_lea.vmem %s1, %s246
        $region36: #{tpu_custom_call.1} parent=27 // pred_fallthru
          _
        // Predicated region
        $region37: #{tpu_custom_call.1} parent=27 // pred_check
          %p248 = pneg %p89
        $region38: #{tpu_custom_call.1} parent=27 // pred_check_branch
          %250 = sbr.rel (%p248) target = $region40
        $region39: #{tpu_custom_call.1} parent=27 // pred_region
          %p251 = scmp.lt.s32.totalorder %s17, 1
          %s252 = scalar_select %p251, %s17, 1
          %s253 = smul.addr %s252, 2
          %s254 = smul.addr %s253, 4
          %s255 = scalar_lea.vmem %s2, %s254
        $region40: #{tpu_custom_call.1} parent=27 // pred_fallthru
          _
      $region28: #{tpu_custom_call.1} parent=5 // pred_fallthru
        _
      %p256 = scmp.le.s32.totalorder 1, %s17
      %p257 = scmp.lt.s32.totalorder %s17, 3
      %p258 = pnand %p256, %p257
      %p259 = pneg %p258
      // Predicated region
      $region41: #{tpu_custom_call.1} parent=5 // pred_check
        _
      $region42: #{tpu_custom_call.1} parent=5 // pred_check_branch
        %261 = sbr.rel (%p258) target = $region44
      $region43: #{tpu_custom_call.1} parent=5 // pred_region
        %s262 = ssub.s32 %s17, 1
        // Predicated region
        $region45: #{tpu_custom_call.1} parent=43 // pred_check
          %p263 = pneg %p116
        $region46: #{tpu_custom_call.1} parent=43 // pred_check_branch
          %265 = sbr.rel (%p263) target = $region48
        $region47: #{tpu_custom_call.1} parent=43 // pred_region
          %266 = dma.done [#allocation3], 1024
        $region48: #{tpu_custom_call.1} parent=43 // pred_fallthru
          _
        // Predicated region
        $region49: #{tpu_custom_call.1} parent=43 // pred_check
          %p267 = pneg %p137
        $region50: #{tpu_custom_call.1} parent=43 // pred_check_branch
          %269 = sbr.rel (%p267) target = $region52
        $region51: #{tpu_custom_call.1} parent=43 // pred_region
          %270 = dma.done [#allocation6], 1024
        $region52: #{tpu_custom_call.1} parent=43 // pred_fallthru
          _
        %p271 = scmp.lt.s32.totalorder %s22, 1
        %s272 = scalar_select %p271, %s22, 1
        %s273 = smul.addr %s272, 2
        %s274 = smul.addr %s273, 4
        %s275 = scalar_lea.vmem %s0, %s274
        %p276 = pneg %p43
        %p277 = pneg %p40
        %p278 = scmp.lt.s32.totalorder %s22, 1
        %s279 = scalar_select %p278, %s22, 1
        %s280 = smul.addr %s279, 2
        %s281 = smul.addr %s280, 8
        %s282 = scalar_lea.vmem %s1, %s281
        %p283 = pneg %p69
        %p284 = pneg %p66
        %p285 = scmp.lt.s32.totalorder %s22, 1
        %s286 = scalar_select %p285, %s22, 1
        %s287 = smul.addr %s286, 2
        %s288 = smul.addr %s287, 4
        %s289 = scalar_lea.vmem %s2, %s288
        %p290 = pneg %p95
        %p291 = pneg %p92
        %p292 = pneg %p116
        %p293 = pneg %p113
        %p294 = pneg %p137
        %p295 = pneg %p134
        %p296 = pneg %p158
        %p297 = pneg %p155
        %p298 = pneg %p184
        %p299 = pneg %p181
        %s300 = sand.u32 %s171, 1
        %s301 = scalar_lea.sflag [#allocation4], %s300
        %s302 = sand.u32 %s171, 1
        %s303 = smul.addr %s302, 16
        %s304 = scalar_lea.vmem [#allocation7], %s303
        %p305 = scmp.lt.s32.totalorder %s22, 1
        %s306 = scalar_select %p305, %s22, 1
        %s307 = smul.addr %s306, 2
        %s308 = smul.addr %s307, 4
        %s309 = scalar_lea.vmem %s0, %s308
        %p310 = scmp.lt.s32.totalorder %s22, 1
        %s311 = scalar_select %p310, %s22, 1
        %s312 = smul.addr %s311, 2
        %s313 = smul.addr %s312, 8
        %s314 = scalar_lea.vmem %s1, %s313
        %p315 = scmp.lt.s32.totalorder %s22, 1
        %s316 = scalar_select %p315, %s22, 1
        %s317 = smul.addr %s316, 2
        %s318 = smul.addr %s317, 4
        %s319 = scalar_lea.vmem %s2, %s318
        %v321 = vld [vmem:[%s309] sm:$0xf]
        %v322 = vld [vmem:[%s309 + $0x4] sm:$0xf]
        %v323 = vld [vmem:[%s314] sm:$0xff]
        %v324 = vld [vmem:[%s314 + $0x8] sm:$0xff]
        %v325 = vld [vmem:[%s319] sm:$0xf]
        %v326 = vld [vmem:[%s319 + $0x4] sm:$0xf]
        %v327 = vunpack.c.l.bf16 %v325
        %v328 = vunpack.c.l.bf16 %v326
        %v329 = vld [vmem:[#allocation2] sm:$0xf]
        %v330 = vld [vmem:[#allocation2 + $0x4] sm:$0xf]
        %v331 = vld [vmem:[#allocation2 + $0x8] sm:$0xf]
        %v332 = vld [vmem:[#allocation2 + $0xc] sm:$0xf]
        %v333 = vld [vmem:[#allocation2 + $0x10] sm:$0xf]
        %v334 = vld [vmem:[#allocation2 + $0x14] sm:$0xf]
        %v335 = vld [vmem:[#allocation2 + $0x18] sm:$0xf]
        %v336 = vld [vmem:[#allocation2 + $0x1c] sm:$0xf]
        %v337 = vld [vmem:[#allocation2 + $0x20] sm:$0xf]
        %v338 = vld [vmem:[#allocation2 + $0x24] sm:$0xf]
        %v339 = vld [vmem:[#allocation2 + $0x28] sm:$0xf]
        %v340 = vld [vmem:[#allocation2 + $0x2c] sm:$0xf]
        %v341 = vld [vmem:[#allocation2 + $0x30] sm:$0xf]
        %v342 = vld [vmem:[#allocation2 + $0x34] sm:$0xf]
        %v343 = vld [vmem:[#allocation2 + $0x38] sm:$0xf]
        %v344 = vld [vmem:[#allocation2 + $0x3c] sm:$0xf]
        %v345 = vld [vmem:[%s5] sm:$0x1]
        %v348 = vunpack.c.l.b16 %v321
        %v349 = vunpack.c.l.b16 %v322
        %v350 = vpack.c.b16 %v349, %v348
        %v353 = vunpack.c.l.b16 %v325
        %v354 = vunpack.c.l.b16 %v326
        %v355 = vpack.c.b16 %v354, %v353
        %vm357 = vcmask 130048
        %v359 = vsel %vm357, %v350, 0
        %361 = vmatprep.subr.bf16.mxu0 0
        %362 = vmatpush1.bf16.msra.mxu0 0
        %363 = vmatprep.subr.bf16.mxu0 0
        %364 = vmatpush1.bf16.msra.mxu0 0
        %365 = vmatprep.subr.bf16.mxu0 0
        %366 = vmatpush1.bf16.msra.mxu0 0
        %367 = vmatprep.subr.bf16.mxu0 0
        %368 = vmatpush1.bf16.msra.mxu0 0
        %369 = vmatprep.subr.bf16.mxu0 0
        %370 = vmatpush1.bf16.msra.mxu0 0
        %371 = vmatprep.subr.bf16.mxu0 0
        %372 = vmatpush1.bf16.msra.mxu0 0
        %373 = vmatprep.subr.bf16.mxu0 0
        %374 = vmatpush1.bf16.msra.mxu0 0
        %375 = vmatprep.subr.bf16.mxu0 0
        %376 = vmatpush1.bf16.msra.mxu0 %v355
        %377 = vmatprep.subr.bf16.mxu0 0
        %378 = vmatpush2.bf16.msra.mxu0 0
        %379 = vmatprep.subr.bf16.mxu0 0
        %380 = vmatpush2.bf16.msra.mxu0 0
        %381 = vmatprep.subr.bf16.mxu0 0
        %382 = vmatpush2.bf16.msra.mxu0 0
        %383 = vmatprep.subr.bf16.mxu0 0
        %384 = vmatpush2.bf16.msra.mxu0 0
        %385 = vmatprep.subr.bf16.mxu0 0
        %386 = vmatpush2.bf16.msra.mxu0 0
        %387 = vmatprep.subr.bf16.mxu0 0
        %388 = vmatpush2.bf16.msra.mxu0 0
        %389 = vmatprep.subr.bf16.mxu0 0
        %390 = vmatpush2.bf16.msra.mxu0 0
        %391 = vmatprep.subr.bf16.mxu0 0
        %392 = vmatpush2.bf16.msra.mxu0 0
        %393 = vmatprep.mubr.bf16.mxu0 0
        %394 = vmatmul.mubr.bf16.gmra.mxu0 %v359
        %v395 = vpop.f32.mrf.mxu0
        %v396 = vadd.f32 %v327, %v395
        %v397 = vpop.f32.mrf.mxu0
        %v398 = vpop.f32.mrf.mxu0
        %v399 = vadd.f32 %v328, %v398
        %v400 = vpop.f32.mrf.mxu0
        %401 = vdwg.mxu0
        %v402 = vpack.c.bf16 %v399, %v396
        %v404 = vlaneseq
        %v405 = vshrl.u32 %v404, 7
        %v406 = vsub.s32 0, %v405
        %v407 = vrot.slane %v345, %v406
        %v425 = vunpack.c.l.b16 %v329
        %v426 = vunpack.c.l.b16 %v330
        %v427 = vunpack.c.l.b16 %v331
        %v428 = vunpack.c.l.b16 %v332
        %v429 = vunpack.c.l.b16 %v333
        %v430 = vunpack.c.l.b16 %v334
        %v431 = vunpack.c.l.b16 %v335
        %v432 = vunpack.c.l.b16 %v336
        %v433 = vunpack.c.l.b16 %v337
        %v434 = vunpack.c.l.b16 %v338
        %v435 = vunpack.c.l.b16 %v339
        %v436 = vunpack.c.l.b16 %v340
        %v437 = vunpack.c.l.b16 %v341
        %v438 = vunpack.c.l.b16 %v342
        %v439 = vunpack.c.l.b16 %v343
        %v440 = vunpack.c.l.b16 %v344
        %v441 = vpack.c.b16 %v426, %v425
        %v442 = vpack.c.b16 %v428, %v427
        %v443 = vpack.c.b16 %v430, %v429
        %v444 = vpack.c.b16 %v432, %v431
        %v445 = vpack.c.b16 %v434, %v433
        %v446 = vpack.c.b16 %v436, %v435
        %v447 = vpack.c.b16 %v438, %v437
        %v448 = vpack.c.b16 %v440, %v439
        %457 = vmatprep.subr.bf16.mxu0 0
        %458 = vmatpush1.bf16.msra.mxu0 %v448
        %459 = vmatprep.subr.bf16.mxu0 0
        %460 = vmatpush1.bf16.msra.mxu0 %v447
        %461 = vmatprep.subr.bf16.mxu0 0
        %462 = vmatpush1.bf16.msra.mxu0 %v446
        %463 = vmatprep.subr.bf16.mxu0 0
        %464 = vmatpush1.bf16.msra.mxu0 %v445
        %465 = vmatprep.subr.bf16.mxu0 0
        %466 = vmatpush1.bf16.msra.mxu0 %v444
        %467 = vmatprep.subr.bf16.mxu0 0
        %468 = vmatpush1.bf16.msra.mxu0 %v443
        %469 = vmatprep.subr.bf16.mxu0 0
        %470 = vmatpush1.bf16.msra.mxu0 %v442
        %471 = vmatprep.subr.bf16.mxu0 0
        %472 = vmatpush1.bf16.msra.mxu0 %v441
        %473 = vmatprep.subr.bf16.mxu0 0
        %474 = vmatpush2.bf16.msra.mxu0 0
        %475 = vmatprep.subr.bf16.mxu0 0
        %476 = vmatpush2.bf16.msra.mxu0 0
        %477 = vmatprep.subr.bf16.mxu0 0
        %478 = vmatpush2.bf16.msra.mxu0 0
        %479 = vmatprep.subr.bf16.mxu0 0
        %480 = vmatpush2.bf16.msra.mxu0 0
        %481 = vmatprep.subr.bf16.mxu0 0
        %482 = vmatpush2.bf16.msra.mxu0 0
        %483 = vmatprep.subr.bf16.mxu0 0
        %484 = vmatpush2.bf16.msra.mxu0 0
        %485 = vmatprep.subr.bf16.mxu0 0
        %486 = vmatpush2.bf16.msra.mxu0 0
        %487 = vmatprep.subr.bf16.mxu0 0
        %488 = vmatpush2.bf16.msra.mxu0 0
        %489 = vmatprep.mubr.bf16.mxu0 0
        %490 = vmatmul.mubr.bf16.gmra.mxu0 %v402
        %v491 = vpop.f32.mrf.mxu0
        %v492 = vadd.f32 %v407, %v491
        %v493 = vpop.f32.mrf.mxu0
        %v494 = vpop.f32.mrf.mxu0
        %v495 = vadd.f32 %v407, %v494
        %v496 = vpop.f32.mrf.mxu0
        %497 = vdwg.mxu0
        %499 = vset.pattern.permute.xlu0 0
        %500 = vperm.xlu0 %499, %v323
        %v501 = vpop.permute.xlu0 %500
        %504 = vset.pattern.permute.xlu0 0
        %505 = vperm.xlu0 %504, %v324
        %v506 = vpop.permute.xlu0 %505
        %v508 = vmul.f32 %v492, %v501
        %v509 = vmul.f32 %v495, %v506
        %v510 = vmax.f32 %v508, 0.0
        %v511 = vmax.f32 %v509, 0.0
        %v512 = vpack.c.bf16 %v511, %v510
        %v513 = vld [vmem:[#allocation5] sm:$0xf]
        %v514 = vld [vmem:[#allocation5 + $0x4] sm:$0xf]
        %v515 = vld [vmem:[#allocation5 + $0x8] sm:$0xf]
        %v516 = vld [vmem:[#allocation5 + $0xc] sm:$0xf]
        %v517 = vld [vmem:[#allocation5 + $0x10] sm:$0xf]
        %v518 = vld [vmem:[#allocation5 + $0x14] sm:$0xf]
        %v519 = vld [vmem:[#allocation5 + $0x18] sm:$0xf]
        %v520 = vld [vmem:[#allocation5 + $0x1c] sm:$0xf]
        %v521 = vld [vmem:[#allocation5 + $0x20] sm:$0xf]
        %v522 = vld [vmem:[#allocation5 + $0x24] sm:$0xf]
        %v523 = vld [vmem:[#allocation5 + $0x28] sm:$0xf]
        %v524 = vld [vmem:[#allocation5 + $0x2c] sm:$0xf]
        %v525 = vld [vmem:[#allocation5 + $0x30] sm:$0xf]
        %v526 = vld [vmem:[#allocation5 + $0x34] sm:$0xf]
        %v527 = vld [vmem:[#allocation5 + $0x38] sm:$0xf]
        %v528 = vld [vmem:[#allocation5 + $0x3c] sm:$0xf]
        %s529 = scalar_lea.vmem %s5, 1
        %v530 = vld [vmem:[%s529] sm:$0x1]
        %531 = vmatprep.subr.bf16.mxu0 0
        %532 = vmatpush1.bf16.msra.mxu0 0
        %533 = vmatprep.subr.bf16.mxu0 0
        %534 = vmatpush1.bf16.msra.mxu0 0
        %535 = vmatprep.subr.bf16.mxu0 0
        %536 = vmatpush1.bf16.msra.mxu0 0
        %537 = vmatprep.subr.bf16.mxu0 0
        %538 = vmatpush1.bf16.msra.mxu0 0
        %539 = vmatprep.subr.bf16.mxu0 0
        %540 = vmatpush1.bf16.msra.mxu0 0
        %541 = vmatprep.subr.bf16.mxu0 0
        %542 = vmatpush1.bf16.msra.mxu0 0
        %543 = vmatprep.subr.bf16.mxu0 0
        %544 = vmatpush1.bf16.msra.mxu0 0
        %545 = vmatprep.subr.bf16.mxu0 0
        %546 = vmatpush1.bf16.msra.mxu0 %v512
        %547 = vmatprep.subr.bf16.mxu0 0
        %548 = vmatpush2.bf16.msra.mxu0 0
        %549 = vmatprep.subr.bf16.mxu0 0
        %550 = vmatpush2.bf16.msra.mxu0 0
        %551 = vmatprep.subr.bf16.mxu0 0
        %552 = vmatpush2.bf16.msra.mxu0 0
        %553 = vmatprep.subr.bf16.mxu0 0
        %554 = vmatpush2.bf16.msra.mxu0 0
        %555 = vmatprep.subr.bf16.mxu0 0
        %556 = vmatpush2.bf16.msra.mxu0 0
        %557 = vmatprep.subr.bf16.mxu0 0
        %558 = vmatpush2.bf16.msra.mxu0 0
        %559 = vmatprep.subr.bf16.mxu0 0
        %560 = vmatpush2.bf16.msra.mxu0 0
        %561 = vmatprep.subr.bf16.mxu0 0
        %562 = vmatpush2.bf16.msra.mxu0 0
        %563 = vmatprep.mubr.bf16.mxu0 0
        %564 = vmatmul.mubr.bf16.gmra.mxu0 %v359
        %v565 = vpop.f32.mrf.mxu0
        %v566 = vadd.f32 %v510, %v565
        %v567 = vpop.f32.mrf.mxu0
        %v568 = vpop.f32.mrf.mxu0
        %v569 = vadd.f32 %v511, %v568
        %v570 = vpop.f32.mrf.mxu0
        %571 = vdwg.mxu0
        %v572 = vpack.c.bf16 %v569, %v566
        %v574 = vlaneseq
        %v575 = vshrl.u32 %v574, 7
        %v576 = vsub.s32 0, %v575
        %v577 = vrot.slane %v530, %v576
        %v595 = vunpack.c.l.b16 %v513
        %v596 = vunpack.c.l.b16 %v514
        %v597 = vunpack.c.l.b16 %v515
        %v598 = vunpack.c.l.b16 %v516
        %v599 = vunpack.c.l.b16 %v517
        %v600 = vunpack.c.l.b16 %v518
        %v601 = vunpack.c.l.b16 %v519
        %v602 = vunpack.c.l.b16 %v520
        %v603 = vunpack.c.l.b16 %v521
        %v604 = vunpack.c.l.b16 %v522
        %v605 = vunpack.c.l.b16 %v523
        %v606 = vunpack.c.l.b16 %v524
        %v607 = vunpack.c.l.b16 %v525
        %v608 = vunpack.c.l.b16 %v526
        %v609 = vunpack.c.l.b16 %v527
        %v610 = vunpack.c.l.b16 %v528
        %v611 = vpack.c.b16 %v596, %v595
        %v612 = vpack.c.b16 %v598, %v597
        %v613 = vpack.c.b16 %v600, %v599
        %v614 = vpack.c.b16 %v602, %v601
        %v615 = vpack.c.b16 %v604, %v603
        %v616 = vpack.c.b16 %v606, %v605
        %v617 = vpack.c.b16 %v608, %v607
        %v618 = vpack.c.b16 %v610, %v609
        %627 = vmatprep.subr.bf16.mxu0 0
        %628 = vmatpush1.bf16.msra.mxu0 %v618
        %629 = vmatprep.subr.bf16.mxu0 0
        %630 = vmatpush1.bf16.msra.mxu0 %v617
        %631 = vmatprep.subr.bf16.mxu0 0
        %632 = vmatpush1.bf16.msra.mxu0 %v616
        %633 = vmatprep.subr.bf16.mxu0 0
        %634 = vmatpush1.bf16.msra.mxu0 %v615
        %635 = vmatprep.subr.bf16.mxu0 0
        %636 = vmatpush1.bf16.msra.mxu0 %v614
        %637 = vmatprep.subr.bf16.mxu0 0
        %638 = vmatpush1.bf16.msra.mxu0 %v613
        %639 = vmatprep.subr.bf16.mxu0 0
        %640 = vmatpush1.bf16.msra.mxu0 %v612
        %641 = vmatprep.subr.bf16.mxu0 0
        %642 = vmatpush1.bf16.msra.mxu0 %v611
        %643 = vmatprep.subr.bf16.mxu0 0
        %644 = vmatpush2.bf16.msra.mxu0 0
        %645 = vmatprep.subr.bf16.mxu0 0
        %646 = vmatpush2.bf16.msra.mxu0 0
        %647 = vmatprep.subr.bf16.mxu0 0
        %648 = vmatpush2.bf16.msra.mxu0 0
        %649 = vmatprep.subr.bf16.mxu0 0
        %650 = vmatpush2.bf16.msra.mxu0 0
        %651 = vmatprep.subr.bf16.mxu0 0
        %652 = vmatpush2.bf16.msra.mxu0 0
        %653 = vmatprep.subr.bf16.mxu0 0
        %654 = vmatpush2.bf16.msra.mxu0 0
        %655 = vmatprep.subr.bf16.mxu0 0
        %656 = vmatpush2.bf16.msra.mxu0 0
        %657 = vmatprep.subr.bf16.mxu0 0
        %658 = vmatpush2.bf16.msra.mxu0 0
        %659 = vmatprep.mubr.bf16.mxu0 0
        %660 = vmatmul.mubr.bf16.gmra.mxu0 %v572
        %v661 = vpop.f32.mrf.mxu0
        %v662 = vadd.f32 %v577, %v661
        %v663 = vpop.f32.mrf.mxu0
        %v664 = vpop.f32.mrf.mxu0
        %v665 = vadd.f32 %v577, %v664
        %v666 = vpop.f32.mrf.mxu0
        %667 = vdwg.mxu0
        %v668 = vmul.f32 %v662, %v501
        %v669 = vmul.f32 %v665, %v506
        %v670 = vmax.f32 %v668, 0.0
        %v671 = vmax.f32 %v669, 0.0
        %672 = vst [vmem:[%s304] sm:$0xff] %v670
        %673 = vst [vmem:[%s304 + $0x8] sm:$0xff] %v671
        %s674 = sand.u32 %s171, 1
        %s675 = scalar_lea.sflag [#allocation4], %s674
        %s676 = sand.u32 %s171, 1
        %s677 = smul.addr %s676, 16
        %s678 = scalar_lea.vmem [#allocation7], %s677
        // Predicated region
        $region53: #{tpu_custom_call.1} parent=43 // pred_check
          %p679 = pneg %p181
        $region54: #{tpu_custom_call.1} parent=43 // pred_check_branch
          %681 = sbr.rel (%p679) target = $region56
        $region55: #{tpu_custom_call.1} parent=43 // pred_region
          %s683 = ssub.s32 256, 256
          %684 = vsyncadd %s675, %s683
          %s685 = smul.addr %s22, 2
          %s686 = smul.addr %s685, 128
          %s687 = scalar_lea.hbm %s6, %s686
          %s688 = sshll.u32 %s678, 4
          %s689 = int_to_ptr.vmem [resolvable:$true] %s688
          %694 = dma.vmem_to_hbm [thread:$0]  %s689, 256, %s687, %s675, 128, 128, 8
        $region56: #{tpu_custom_call.1} parent=43 // pred_fallthru
          _
      $region44: #{tpu_custom_call.1} parent=5 // pred_fallthru
        _
      %p695 = scmp.le.s32.totalorder 2, %s17
      // Predicated region
      $region57: #{tpu_custom_call.1} parent=5 // pred_check
        %p696 = pneg %p695
      $region58: #{tpu_custom_call.1} parent=5 // pred_check_branch
        %698 = sbr.rel (%p696) target = $region60
      $region59: #{tpu_custom_call.1} parent=5 // pred_region
        %s699 = ssub.s32 %s17, 2
        // Predicated region
        $region61: #{tpu_custom_call.1} parent=59 // pred_check
          %p700 = pneg %p187
        $region62: #{tpu_custom_call.1} parent=59 // pred_check_branch
          %702 = sbr.rel (%p700) target = $region64
        $region63: #{tpu_custom_call.1} parent=59 // pred_region
          %s703 = sand.u32 %s172, 1
          %s704 = scalar_lea.sflag [#allocation4], %s703
          %s705 = sand.u32 %s172, 1
          %s706 = smul.addr %s705, 16
          %s707 = scalar_lea.vmem [#allocation7], %s706
          %708 = dma.done %s704, 256
        $region64: #{tpu_custom_call.1} parent=59 // pred_fallthru
          _
      $region60: #{tpu_custom_call.1} parent=5 // pred_fallthru
        _
    $region6: #{tpu_custom_call.1} parent=1 // loop_footer
      %s21 = sadd.s32 1, %s17
    $region7: #{tpu_custom_call.1} parent=1 // loop_footer_branch
      %16 = sbr.rel target = $region3
    $region8: #{tpu_custom_call.1} parent=1 // loop_exit
      _
    %709 = vsyncpa [#allocation3], 1
    %s710 = scalar_lea.sflag [#allocation3], 1
    %711 = vsyncpa %s710, 1
    %712 = vsyncpa [#allocation6], 1
    %713 = vsyncpa [#allocation4], 1
    %s714 = scalar_lea.sflag [#allocation4], 1
    %715 = vsyncpa %s714, 1

// kernel: tpu_custom_call.1
$region0: #{tpu_custom_call.1}
  #allocation0 [shape = 'u32[]', space=smem, size = 0x4, offset = 0x4, fixed_abs, tag = 'smem constant byte address 0x4 - core index']
  #allocation1 [shape = 'u32[144,128]{1,0:T(1,128)}', space=vmem, size = 0x12000, scoped, tag = 'internal scratch']
  %s0 = inlined_call_operand.vmem [shape: bf16[2,16,16], index: 0, kind: input, shape index: {}]
  %s1 = inlined_call_operand.vmem [shape: f32[2,16,1], index: 1, kind: input, shape index: {}]
  %s2 = inlined_call_operand.vmem [shape: bf16[2,16,128], index: 2, kind: input, shape index: {}]
  %s3 = inlined_call_operand.hbm [shape: bf16[128,128], index: 3, kind: input, shape index: {}]
  %s4 = inlined_call_operand.hbm [shape: bf16[1,128,128], index: 4, kind: input, shape index: {}]
  %s5 = inlined_call_operand.vmem [shape: f32[2,1,128], index: 5, kind: input, shape index: {}]
  %s6 = inlined_call_operand.hbm [shape: f32[2,16,128], index: 6, kind: output, shape index: {}]
  %s7 = sld [smem:[#allocation0]]
  $region65: #{tpu_custom_call.1} parent=0
    _
  %s9 = ssub.s32 1, %s7
  %s10 = scalar_select 0, %s9, %s7
  $region1: #{tpu_custom_call.1} parent=0
    #allocation2 [shape = 'u8[32768]{0}', space=vmem, size = 0x8000, scoped, tag = 'input window, operand 3, single buffered']
    #allocation3 [shape = 's32[2]{0}', space=sflag, size = 0x8, scoped, tag = 'scoped memory for tpu_custom_call.1']
    #allocation4 [shape = 's32[2]{0}', space=sflag, size = 0x8, scoped, tag = 'scoped memory for tpu_custom_call.1']
    #allocation5 [shape = 'u8[32768]{0}', space=vmem, size = 0x8000, scoped, tag = 'input window, operand 4, single buffered']
    #allocation6 [shape = 's32[1]{0}', space=sflag, size = 0x4, scoped, tag = 'scoped memory for tpu_custom_call.1']
    #allocation7 [shape = 'u8[16384]{0}', space=vmem, size = 0x4000, scoped, tag = 'output window, operand 0']
    %11 = vsyncpa [#allocation3], 0
    %12 = vsyncpa [#allocation6], 0
    %13 = vsyncpa [#allocation4], 0
    %s14 = scalar_lea.sflag [#allocation4], 1
    %15 = vsyncpa %s14, 0
    loop: start=0, step=1, limit=4
    $region2: #{tpu_custom_call.1} parent=1 // loop_pre_header
      _
    $region3: #{tpu_custom_call.1} parent=1 // loop_header
      %s17 = sphi 0, %s21
      %p18 = scmp.ge.s32.totalorder %s17, 4
      %s27 = sphi 0, %s29
      %s30 = sphi 0, %s27
      %s31 = sphi 0, %s30
      %s47 = sphi 0, %s31
      %s53 = sphi 0, %s55
      %s56 = sphi 0, %s53
      %s57 = sphi 0, %s56
      %s73 = sphi 0, %s57
      %s79 = sphi 0, %s81
      %s82 = sphi 0, %s79
      %s83 = sphi 0, %s82
      %s99 = sphi 0, %s83
      %s103 = sphi 0, %s103
      %s105 = sphi 0, %s103
      %s106 = sphi 0, %s105
      %s120 = sphi 0, %s106
      %s124 = sphi 0, %s124
      %s126 = sphi 0, %s124
      %s127 = sphi 0, %s126
      %s141 = sphi 0, %s127
      %s145 = sphi 0, %s145
      %s147 = sphi 0, %s145
      %s148 = sphi 0, %s147
      %s162 = sphi 0, %s148
      %s168 = sphi 0, %s170
      %s171 = sphi 0, %s168
      %s172 = sphi 0, %s171
      %s188 = sphi 0, %s172
    $region4: #{tpu_custom_call.1} parent=1 // loop_header_branch
      %20 = sbr.rel (%p18) target = $region8
    $region5: #{tpu_custom_call.1} parent=1 // loop_body
      %s22 = ssub.s32 %s17, 1
      %s23 = ssub.s32 %s17, 2
      %s24 = sadd.s32 %s17, 1
      %s25 = ssub.s32 %s17, %s24
      %p26 = scmp.eq.s32.totalorder %s25, 0
      %s28 = sadd.s32 %s27, 1
      %s29 = scalar_select %p26, %s27, %s28
      %p32 = pneg %p26
      %p33 = scmp.eq.s32.totalorder %s17, 1
      %p34 = por %p32, %p33
      %p35 = scmp.ne.s32.totalorder %s27, %s30
      %p36 = scmp.eq.s32.totalorder %s17, 0
      %p37 = por %p35, %p36
      %p38 = scmp.ne.s32.totalorder %s27, %s30
      %p39 = scmp.eq.s32.totalorder %s22, 1
      %p40 = por %p38, %p39
      %p41 = scmp.ne.s32.totalorder %s30, %s31
      %p42 = scmp.eq.s32.totalorder %s22, 0
      %p43 = por %p41, %p42
      %p44 = scmp.ne.s32.totalorder %s30, %s31
      %p45 = scmp.eq.s32.totalorder %s23, 1
      %p46 = por %p44, %p45
      %p48 = scmp.ne.s32.totalorder %s31, %s47
      %p49 = scmp.eq.s32.totalorder %s23, 0
      %p50 = por %p48, %p49
      %s51 = ssub.s32 %s17, %s24
      %p52 = scmp.eq.s32.totalorder %s51, 0
      %s54 = sadd.s32 %s53, 1
      %s55 = scalar_select %p52, %s53, %s54
      %p58 = pneg %p52
      %p59 = scmp.eq.s32.totalorder %s17, 1
      %p60 = por %p58, %p59
      %p61 = scmp.ne.s32.totalorder %s53, %s56
      %p62 = scmp.eq.s32.totalorder %s17, 0
      %p63 = por %p61, %p62
      %p64 = scmp.ne.s32.totalorder %s53, %s56
      %p65 = scmp.eq.s32.totalorder %s22, 1
      %p66 = por %p64, %p65
      %p67 = scmp.ne.s32.totalorder %s56, %s57
      %p68 = scmp.eq.s32.totalorder %s22, 0
      %p69 = por %p67, %p68
      %p70 = scmp.ne.s32.totalorder %s56, %s57
      %p71 = scmp.eq.s32.totalorder %s23, 1
      %p72 = por %p70, %p71
      %p74 = scmp.ne.s32.totalorder %s57, %s73
      %p75 = scmp.eq.s32.totalorder %s23, 0
      %p76 = por %p74, %p75
      %s77 = ssub.s32 %s17, %s24
      %p78 = scmp.eq.s32.totalorder %s77, 0
      %s80 = sadd.s32 %s79, 1
      %s81 = scalar_select %p78, %s79, %s80
      %p84 = pneg %p78
      %p85 = scmp.eq.s32.totalorder %s17, 1
      %p86 = por %p84, %p85
      %p87 = scmp.ne.s32.totalorder %s79, %s82
      %p88 = scmp.eq.s32.totalorder %s17, 0
      %p89 = por %p87, %p88
      %p90 = scmp.ne.s32.totalorder %s79, %s82
      %p91 = scmp.eq.s32.totalorder %s22, 1
      %p92 = por %p90, %p91
      %p93 = scmp.ne.s32.totalorder %s82, %s83
      %p94 = scmp.eq.s32.totalorder %s22, 0
      %p95 = por %p93, %p94
      %p96 = scmp.ne.s32.totalorder %s82, %s83
      %p97 = scmp.eq.s32.totalorder %s23, 1
      %p98 = por %p96, %p97
      %p100 = scmp.ne.s32.totalorder %s83, %s99
      %p101 = scmp.eq.s32.totalorder %s23, 0
      %p102 = por %p100, %p101
      %s104 = sadd.s32 %s103, 1
      %p107 = scmp.eq.s32.totalorder %s17, 1
      %p108 = scmp.ne.s32.totalorder %s103, %s105
      %p109 = scmp.eq.s32.totalorder %s17, 0
      %p110 = por %p108, %p109
      %p111 = scmp.ne.s32.totalorder %s103, %s105
      %p112 = scmp.eq.s32.totalorder %s22, 1
      %p113 = por %p111, %p112
      %p114 = scmp.ne.s32.totalorder %s105, %s106
      %p115 = scmp.eq.s32.totalorder %s22, 0
      %p116 = por %p114, %p115
      %p117 = scmp.ne.s32.totalorder %s105, %s106
      %p118 = scmp.eq.s32.totalorder %s23, 1
      %p119 = por %p117, %p118
      %p121 = scmp.ne.s32.totalorder %s106, %s120
      %p122 = scmp.eq.s32.totalorder %s23, 0
      %p123 = por %p121, %p122
      %s125 = sadd.s32 %s124, 1
      %p128 = scmp.eq.s32.totalorder %s17, 1
      %p129 = scmp.ne.s32.totalorder %s124, %s126
      %p130 = scmp.eq.s32.totalorder %s17, 0
      %p131 = por %p129, %p130
      %p132 = scmp.ne.s32.totalorder %s124, %s126
      %p133 = scmp.eq.s32.totalorder %s22, 1
      %p134 = por %p132, %p133
      %p135 = scmp.ne.s32.totalorder %s126, %s127
      %p136 = scmp.eq.s32.totalorder %s22, 0
      %p137 = por %p135, %p136
      %p138 = scmp.ne.s32.totalorder %s126, %s127
      %p139 = scmp.eq.s32.totalorder %s23, 1
      %p140 = por %p138, %p139
      %p142 = scmp.ne.s32.totalorder %s127, %s141
      %p143 = scmp.eq.s32.totalorder %s23, 0
      %p144 = por %p142, %p143
      %s146 = sadd.s32 %s145, 1
      %p149 = scmp.eq.s32.totalorder %s17, 1
      %p150 = scmp.ne.s32.totalorder %s145, %s147
      %p151 = scmp.eq.s32.totalorder %s17, 0
      %p152 = por %p150, %p151
      %p153 = scmp.ne.s32.totalorder %s145, %s147
      %p154 = scmp.eq.s32.totalorder %s22, 1
      %p155 = por %p153, %p154
      %p156 = scmp.ne.s32.totalorder %s147, %s148
      %p157 = scmp.eq.s32.totalorder %s22, 0
      %p158 = por %p156, %p157
      %p159 = scmp.ne.s32.totalorder %s147, %s148
      %p160 = scmp.eq.s32.totalorder %s23, 1
      %p161 = por %p159, %p160
      %p163 = scmp.ne.s32.totalorder %s148, %s162
      %p164 = scmp.eq.s32.totalorder %s23, 0
      %p165 = por %p163, %p164
      %s166 = ssub.s32 %s17, %s24
      %p167 = scmp.eq.s32.totalorder %s166, 0
      %s169 = sadd.s32 %s168, 1
      %s170 = scalar_select %p167, %s168, %s169
      %p173 = pneg %p167
      %p174 = scmp.eq.s32.totalorder %s17, 1
      %p175 = por %p173, %p174
      %p176 = scmp.ne.s32.totalorder %s168, %s171
      %p177 = scmp.eq.s32.totalorder %s17, 0
      %p178 = por %p176, %p177
      %p179 = scmp.ne.s32.totalorder %s168, %s171
      %p180 = scmp.eq.s32.totalorder %s22, 1
      %p181 = por %p179, %p180
      %p182 = scmp.ne.s32.totalorder %s171, %s172
      %p183 = scmp.eq.s32.totalorder %s22, 0
      %p184 = por %p182, %p183
      %p185 = scmp.ne.s32.totalorder %s171, %s172
      %p186 = scmp.eq.s32.totalorder %s23, 1
      %p187 = por %p185, %p186
      %p189 = scmp.ne.s32.totalorder %s172, %s188
      %p190 = scmp.eq.s32.totalorder %s23, 0
      %p191 = por %p189, %p190
      %p192 = scmp.le.s32.totalorder 1, %s17
      %p193 = scmp.lt.s32.totalorder %s17, 3
      %p194 = pnand %p192, %p193
      %p195 = pneg %p194
      // Predicated region
      $region9: #{tpu_custom_call.1} parent=5 // pred_check
        _
      $region10: #{tpu_custom_call.1} parent=5 // pred_check_branch
        %197 = sbr.rel (%p194) target = $region12
      $region11: #{tpu_custom_call.1} parent=5 // pred_region
        %s198 = ssub.s32 %s17, 1
        // Predicated region
        $region13: #{tpu_custom_call.1} parent=11 // pred_check
          %p199 = pneg %p116
        $region14: #{tpu_custom_call.1} parent=11 // pred_check_branch
          %201 = sbr.rel (%p199) target = $region16
        $region15: #{tpu_custom_call.1} parent=11 // pred_region
          %s203 = ssub.s32 1024, 1024
          %204 = vsyncadd [#allocation3], %s203
          %s205 = sshll.u32 [#allocation2], 4
          %s206 = int_to_ptr.vmem [resolvable:$true] %s205
          %211 = dma.hbm_to_vmem [thread:$0]  %s3, 1024, %s206, [#allocation3], 64, 64, 4
        $region16: #{tpu_custom_call.1} parent=11 // pred_fallthru
          _
        // Predicated region
        $region17: #{tpu_custom_call.1} parent=11 // pred_check
          %p212 = pneg %p137
        $region18: #{tpu_custom_call.1} parent=11 // pred_check_branch
          %214 = sbr.rel (%p212) target = $region20
        $region19: #{tpu_custom_call.1} parent=11 // pred_region
          %s216 = ssub.s32 1024, 1024
          %217 = vsyncadd [#allocation6], %s216
          %s218 = sshll.u32 [#allocation5], 4
          %s219 = int_to_ptr.vmem [resolvable:$true] %s218
          %224 = dma.hbm_to_vmem [thread:$0]  %s4, 1024, %s219, [#allocation6], 64, 64, 4
        $region20: #{tpu_custom_call.1} parent=11 // pred_fallthru
          _
        // Predicated region
        $region21: #{tpu_custom_call.1} parent=11 // pred_check
          %p225 = pneg %p158
        $region22: #{tpu_custom_call.1} parent=11 // pred_check_branch
          %227 = sbr.rel (%p225) target = $region24
        $region23: #{tpu_custom_call.1} parent=11 // pred_region
          _
        $region24: #{tpu_custom_call.1} parent=11 // pred_fallthru
          _
      $region12: #{tpu_custom_call.1} parent=5 // pred_fallthru
        _
      %p228 = scmp.lt.s32.totalorder %s17, 2
      // Predicated region
      $region25: #{tpu_custom_call.1} parent=5 // pred_check
        %p229 = pneg %p228
      $region26: #{tpu_custom_call.1} parent=5 // pred_check_branch
        %231 = sbr.rel (%p229) target = $region28
      $region27: #{tpu_custom_call.1} parent=5 // pred_region
        // Predicated region
        $region29: #{tpu_custom_call.1} parent=27 // pred_check
          %p232 = pneg %p37
        $region30: #{tpu_custom_call.1} parent=27 // pred_check_branch
          %234 = sbr.rel (%p232) target = $region32
        $region31: #{tpu_custom_call.1} parent=27 // pred_region
          %p235 = scmp.lt.s32.totalorder %s17, 1
          %s236 = scalar_select %p235, %s17, 1
          %s237 = smul.addr %s236, 2
          %s238 = smul.addr %s237, 4
          %s239 = scalar_lea.vmem %s0, %s238
        $region32: #{tpu_custom_call.1} parent=27 // pred_fallthru
          _
        // Predicated region
        $region33: #{tpu_custom_call.1} parent=27 // pred_check
          %p240 = pneg %p63
        $region34: #{tpu_custom_call.1} parent=27 // pred_check_branch
          %242 = sbr.rel (%p240) target = $region36
        $region35: #{tpu_custom_call.1} parent=27 // pred_region
          %p243 = scmp.lt.s32.totalorder %s17, 1
          %s244 = scalar_select %p243, %s17, 1
          %s245 = smul.addr %s244, 2
          %s246 = smul.addr %s245, 8
          %s247 = scalar_lea.vmem %s1, %s246
        $region36: #{tpu_custom_call.1} parent=27 // pred_fallthru
          _
        // Predicated region
        $region37: #{tpu_custom_call.1} parent=27 // pred_check
          %p248 = pneg %p89
        $region38: #{tpu_custom_call.1} parent=27 // pred_check_branch
          %250 = sbr.rel (%p248) target = $region40
        $region39: #{tpu_custom_call.1} parent=27 // pred_region
          %p251 = scmp.lt.s32.totalorder %s17, 1
          %s252 = scalar_select %p251, %s17, 1
          %s253 = smul.addr %s252, 2
          %s254 = smul.addr %s253, 4
          %s255 = scalar_lea.vmem %s2, %s254
        $region40: #{tpu_custom_call.1} parent=27 // pred_fallthru
          _
      $region28: #{tpu_custom_call.1} parent=5 // pred_fallthru
        _
      %p256 = scmp.le.s32.totalorder 1, %s17
      %p257 = scmp.lt.s32.totalorder %s17, 3
      %p258 = pnand %p256, %p257
      %p259 = pneg %p258
      // Predicated region
      $region41: #{tpu_custom_call.1} parent=5 // pred_check
        _
      $region42: #{tpu_custom_call.1} parent=5 // pred_check_branch
        %261 = sbr.rel (%p258) target = $region44
      $region43: #{tpu_custom_call.1} parent=5 // pred_region
        %s262 = ssub.s32 %s17, 1
        // Predicated region
        $region45: #{tpu_custom_call.1} parent=43 // pred_check
          %p263 = pneg %p116
        $region46: #{tpu_custom_call.1} parent=43 // pred_check_branch
          %265 = sbr.rel (%p263) target = $region48
        $region47: #{tpu_custom_call.1} parent=43 // pred_region
          %266 = dma.done [#allocation3], 1024
        $region48: #{tpu_custom_call.1} parent=43 // pred_fallthru
          _
        // Predicated region
        $region49: #{tpu_custom_call.1} parent=43 // pred_check
          %p267 = pneg %p137
        $region50: #{tpu_custom_call.1} parent=43 // pred_check_branch
          %269 = sbr.rel (%p267) target = $region52
        $region51: #{tpu_custom_call.1} parent=43 // pred_region
          %270 = dma.done [#allocation6], 1024
        $region52: #{tpu_custom_call.1} parent=43 // pred_fallthru
          _
        %p271 = scmp.lt.s32.totalorder %s22, 1
        %s272 = scalar_select %p271, %s22, 1
        %s273 = smul.addr %s272, 2
        %s274 = smul.addr %s273, 4
        %s275 = scalar_lea.vmem %s0, %s274
        %p276 = pneg %p43
        %p277 = pneg %p40
        %p278 = scmp.lt.s32.totalorder %s22, 1
        %s279 = scalar_select %p278, %s22, 1
        %s280 = smul.addr %s279, 2
        %s281 = smul.addr %s280, 8
        %s282 = scalar_lea.vmem %s1, %s281
        %p283 = pneg %p69
        %p284 = pneg %p66
        %p285 = scmp.lt.s32.totalorder %s22, 1
        %s286 = scalar_select %p285, %s22, 1
        %s287 = smul.addr %s286, 2
        %s288 = smul.addr %s287, 4
        %s289 = scalar_lea.vmem %s2, %s288
        %p290 = pneg %p95
        %p291 = pneg %p92
        %p292 = pneg %p116
        %p293 = pneg %p113
        %p294 = pneg %p137
        %p295 = pneg %p134
        %p296 = pneg %p158
        %p297 = pneg %p155
        %p298 = pneg %p184
        %p299 = pneg %p181
        %s300 = sand.u32 %s171, 1
        %s301 = scalar_lea.sflag [#allocation4], %s300
        %s302 = sand.u32 %s171, 1
        %s303 = smul.addr %s302, 16
        %s304 = scalar_lea.vmem [#allocation7], %s303
        %p305 = scmp.lt.s32.totalorder %s22, 1
        %s306 = scalar_select %p305, %s22, 1
        %s307 = smul.addr %s306, 2
        %s308 = smul.addr %s307, 4
        %s309 = scalar_lea.vmem %s0, %s308
        %p310 = scmp.lt.s32.totalorder %s22, 1
        %s311 = scalar_select %p310, %s22, 1
        %s312 = smul.addr %s311, 2
        %s313 = smul.addr %s312, 8
        %s314 = scalar_lea.vmem %s1, %s313
        %p315 = scmp.lt.s32.totalorder %s22, 1
        %s316 = scalar_select %p315, %s22, 1
        %s317 = smul.addr %s316, 2
        %s318 = smul.addr %s317, 4
        %s319 = scalar_lea.vmem %s2, %s318
        %v321 = vld [vmem:[%s309] sm:$0xf]
        %v322 = vld [vmem:[%s309 + $0x4] sm:$0xf]
        %v323 = vld [vmem:[%s314] sm:$0xff]
        %v324 = vld [vmem:[%s314 + $0x8] sm:$0xff]
        %v325 = vld [vmem:[%s319] sm:$0xf]
        %v326 = vld [vmem:[%s319 + $0x4] sm:$0xf]
        %v327 = vunpack.c.l.bf16 %v325
        %v328 = vunpack.c.l.bf16 %v326
        %v329 = vld [vmem:[#allocation2] sm:$0xf]
        %v330 = vld [vmem:[#allocation2 + $0x4] sm:$0xf]
        %v331 = vld [vmem:[#allocation2 + $0x8] sm:$0xf]
        %v332 = vld [vmem:[#allocation2 + $0xc] sm:$0xf]
        %v333 = vld [vmem:[#allocation2 + $0x10] sm:$0xf]
        %v334 = vld [vmem:[#allocation2 + $0x14] sm:$0xf]
        %v335 = vld [vmem:[#allocation2 + $0x18] sm:$0xf]
        %v336 = vld [vmem:[#allocation2 + $0x1c] sm:$0xf]
        %v337 = vld [vmem:[#allocation2 + $0x20] sm:$0xf]
        %v338 = vld [vmem:[#allocation2 + $0x24] sm:$0xf]
        %v339 = vld [vmem:[#allocation2 + $0x28] sm:$0xf]
        %v340 = vld [vmem:[#allocation2 + $0x2c] sm:$0xf]
        %v341 = vld [vmem:[#allocation2 + $0x30] sm:$0xf]
        %v342 = vld [vmem:[#allocation2 + $0x34] sm:$0xf]
        %v343 = vld [vmem:[#allocation2 + $0x38] sm:$0xf]
        %v344 = vld [vmem:[#allocation2 + $0x3c] sm:$0xf]
        %v345 = vld [vmem:[%s5] sm:$0x1]
        %v348 = vunpack.c.l.b16 %v321
        %v349 = vunpack.c.l.b16 %v322
        %v350 = vpack.c.b16 %v349, %v348
        %v353 = vunpack.c.l.b16 %v325
        %v354 = vunpack.c.l.b16 %v326
        %v355 = vpack.c.b16 %v354, %v353
        %vm357 = vcmask 130048
        %v359 = vsel %vm357, %v350, 0
        %361 = vmatprep.subr.bf16.mxu0 0
        %362 = vmatpush1.bf16.msra.mxu0 0
        %363 = vmatprep.subr.bf16.mxu0 0
        %364 = vmatpush1.bf16.msra.mxu0 0
        %365 = vmatprep.subr.bf16.mxu0 0
        %366 = vmatpush1.bf16.msra.mxu0 0
        %367 = vmatprep.subr.bf16.mxu0 0
        %368 = vmatpush1.bf16.msra.mxu0 0
        %369 = vmatprep.subr.bf16.mxu0 0
        %370 = vmatpush1.bf16.msra.mxu0 0
        %371 = vmatprep.subr.bf16.mxu0 0
        %372 = vmatpush1.bf16.msra.mxu0 0
        %373 = vmatprep.subr.bf16.mxu0 0
        %374 = vmatpush1.bf16.msra.mxu0 0
        %375 = vmatprep.subr.bf16.mxu0 0
        %376 = vmatpush1.bf16.msra.mxu0 %v355
        %377 = vmatprep.subr.bf16.mxu0 0
        %378 = vmatpush2.bf16.msra.mxu0 0
        %379 = vmatprep.subr.bf16.mxu0 0
        %380 = vmatpush2.bf16.msra.mxu0 0
        %381 = vmatprep.subr.bf16.mxu0 0
        %382 = vmatpush2.bf16.msra.mxu0 0
        %383 = vmatprep.subr.bf16.mxu0 0
        %384 = vmatpush2.bf16.msra.mxu0 0
        %385 = vmatprep.subr.bf16.mxu0 0
        %386 = vmatpush2.bf16.msra.mxu0 0
        %387 = vmatprep.subr.bf16.mxu0 0
        %388 = vmatpush2.bf16.msra.mxu0 0
        %389 = vmatprep.subr.bf16.mxu0 0
        %390 = vmatpush2.bf16.msra.mxu0 0
        %391 = vmatprep.subr.bf16.mxu0 0
        %392 = vmatpush2.bf16.msra.mxu0 0
        %393 = vmatprep.mubr.bf16.mxu0 0
        %394 = vmatmul.mubr.bf16.gmra.mxu0 %v359
        %v395 = vpop.f32.mrf.mxu0
        %v396 = vadd.f32 %v327, %v395
        %v397 = vpop.f32.mrf.mxu0
        %v398 = vpop.f32.mrf.mxu0
        %v399 = vadd.f32 %v328, %v398
        %v400 = vpop.f32.mrf.mxu0
        %401 = vdwg.mxu0
        %v402 = vpack.c.bf16 %v399, %v396
        %v404 = vlaneseq
        %v405 = vshrl.u32 %v404, 7
        %v406 = vsub.s32 0, %v405
        %v407 = vrot.slane %v345, %v406
        %v425 = vunpack.c.l.b16 %v329
        %v426 = vunpack.c.l.b16 %v330
        %v427 = vunpack.c.l.b16 %v331
        %v428 = vunpack.c.l.b16 %v332
        %v429 = vunpack.c.l.b16 %v333
        %v430 = vunpack.c.l.b16 %v334
        %v431 = vunpack.c.l.b16 %v335
        %v432 = vunpack.c.l.b16 %v336
        %v433 = vunpack.c.l.b16 %v337
        %v434 = vunpack.c.l.b16 %v338
        %v435 = vunpack.c.l.b16 %v339
        %v436 = vunpack.c.l.b16 %v340
        %v437 = vunpack.c.l.b16 %v341
        %v438 = vunpack.c.l.b16 %v342
        %v439 = vunpack.c.l.b16 %v343
        %v440 = vunpack.c.l.b16 %v344
        %v441 = vpack.c.b16 %v426, %v425
        %v442 = vpack.c.b16 %v428, %v427
        %v443 = vpack.c.b16 %v430, %v429
        %v444 = vpack.c.b16 %v432, %v431
        %v445 = vpack.c.b16 %v434, %v433
        %v446 = vpack.c.b16 %v436, %v435
        %v447 = vpack.c.b16 %v438, %v437
        %v448 = vpack.c.b16 %v440, %v439
        %457 = vmatprep.subr.bf16.mxu0 0
        %458 = vmatpush1.bf16.msra.mxu0 %v448
        %459 = vmatprep.subr.bf16.mxu0 0
        %460 = vmatpush1.bf16.msra.mxu0 %v447
        %461 = vmatprep.subr.bf16.mxu0 0
        %462 = vmatpush1.bf16.msra.mxu0 %v446
        %463 = vmatprep.subr.bf16.mxu0 0
        %464 = vmatpush1.bf16.msra.mxu0 %v445
        %465 = vmatprep.subr.bf16.mxu0 0
        %466 = vmatpush1.bf16.msra.mxu0 %v444
        %467 = vmatprep.subr.bf16.mxu0 0
        %468 = vmatpush1.bf16.msra.mxu0 %v443
        %469 = vmatprep.subr.bf16.mxu0 0
        %470 = vmatpush1.bf16.msra.mxu0 %v442
        %471 = vmatprep.subr.bf16.mxu0 0
        %472 = vmatpush1.bf16.msra.mxu0 %v441
        %473 = vmatprep.subr.bf16.mxu0 0
        %474 = vmatpush2.bf16.msra.mxu0 0
        %475 = vmatprep.subr.bf16.mxu0 0
        %476 = vmatpush2.bf16.msra.mxu0 0
        %477 = vmatprep.subr.bf16.mxu0 0
        %478 = vmatpush2.bf16.msra.mxu0 0
        %479 = vmatprep.subr.bf16.mxu0 0
        %480 = vmatpush2.bf16.msra.mxu0 0
        %481 = vmatprep.subr.bf16.mxu0 0
        %482 = vmatpush2.bf16.msra.mxu0 0
        %483 = vmatprep.subr.bf16.mxu0 0
        %484 = vmatpush2.bf16.msra.mxu0 0
        %485 = vmatprep.subr.bf16.mxu0 0
        %486 = vmatpush2.bf16.msra.mxu0 0
        %487 = vmatprep.subr.bf16.mxu0 0
        %488 = vmatpush2.bf16.msra.mxu0 0
        %489 = vmatprep.mubr.bf16.mxu0 0
        %490 = vmatmul.mubr.bf16.gmra.mxu0 %v402
        %v491 = vpop.f32.mrf.mxu0
        %v492 = vadd.f32 %v407, %v491
        %v493 = vpop.f32.mrf.mxu0
        %v494 = vpop.f32.mrf.mxu0
        %v495 = vadd.f32 %v407, %v494
        %v496 = vpop.f32.mrf.mxu0
        %497 = vdwg.mxu0
        %499 = vset.pattern.permute.xlu0 0
        %500 = vperm.xlu0 %499, %v323
        %v501 = vpop.permute.xlu0 %500
        %504 = vset.pattern.permute.xlu0 0
        %505 = vperm.xlu0 %504, %v324
        %v506 = vpop.permute.xlu0 %505
        %v508 = vmul.f32 %v492, %v501
        %v509 = vmul.f32 %v495, %v506
        %v510 = vmax.f32 %v508, 0.0
        %v511 = vmax.f32 %v509, 0.0
        %v512 = vpack.c.bf16 %v511, %v510
        %v513 = vld [vmem:[#allocation5] sm:$0xf]
        %v514 = vld [vmem:[#allocation5 + $0x4] sm:$0xf]
        %v515 = vld [vmem:[#allocation5 + $0x8] sm:$0xf]
        %v516 = vld [vmem:[#allocation5 + $0xc] sm:$0xf]
        %v517 = vld [vmem:[#allocation5 + $0x10] sm:$0xf]
        %v518 = vld [vmem:[#allocation5 + $0x14] sm:$0xf]
        %v519 = vld [vmem:[#allocation5 + $0x18] sm:$0xf]
        %v520 = vld [vmem:[#allocation5 + $0x1c] sm:$0xf]
        %v521 = vld [vmem:[#allocation5 + $0x20] sm:$0xf]
        %v522 = vld [vmem:[#allocation5 + $0x24] sm:$0xf]
        %v523 = vld [vmem:[#allocation5 + $0x28] sm:$0xf]
        %v524 = vld [vmem:[#allocation5 + $0x2c] sm:$0xf]
        %v525 = vld [vmem:[#allocation5 + $0x30] sm:$0xf]
        %v526 = vld [vmem:[#allocation5 + $0x34] sm:$0xf]
        %v527 = vld [vmem:[#allocation5 + $0x38] sm:$0xf]
        %v528 = vld [vmem:[#allocation5 + $0x3c] sm:$0xf]
        %s529 = scalar_lea.vmem %s5, 1
        %v530 = vld [vmem:[%s529] sm:$0x1]
        %531 = vmatprep.subr.bf16.mxu0 0
        %532 = vmatpush1.bf16.msra.mxu0 0
        %533 = vmatprep.subr.bf16.mxu0 0
        %534 = vmatpush1.bf16.msra.mxu0 0
        %535 = vmatprep.subr.bf16.mxu0 0
        %536 = vmatpush1.bf16.msra.mxu0 0
        %537 = vmatprep.subr.bf16.mxu0 0
        %538 = vmatpush1.bf16.msra.mxu0 0
        %539 = vmatprep.subr.bf16.mxu0 0
        %540 = vmatpush1.bf16.msra.mxu0 0
        %541 = vmatprep.subr.bf16.mxu0 0
        %542 = vmatpush1.bf16.msra.mxu0 0
        %543 = vmatprep.subr.bf16.mxu0 0
        %544 = vmatpush1.bf16.msra.mxu0 0
        %545 = vmatprep.subr.bf16.mxu0 0
        %546 = vmatpush1.bf16.msra.mxu0 %v512
        %547 = vmatprep.subr.bf16.mxu0 0
        %548 = vmatpush2.bf16.msra.mxu0 0
        %549 = vmatprep.subr.bf16.mxu0 0
        %550 = vmatpush2.bf16.msra.mxu0 0
        %551 = vmatprep.subr.bf16.mxu0 0
        %552 = vmatpush2.bf16.msra.mxu0 0
        %553 = vmatprep.subr.bf16.mxu0 0
        %554 = vmatpush2.bf16.msra.mxu0 0
        %555 = vmatprep.subr.bf16.mxu0 0
        %556 = vmatpush2.bf16.msra.mxu0 0
        %557 = vmatprep.subr.bf16.mxu0 0
        %558 = vmatpush2.bf16.msra.mxu0 0
        %559 = vmatprep.subr.bf16.mxu0 0
        %560 = vmatpush2.bf16.msra.mxu0 0
        %561 = vmatprep.subr.bf16.mxu0 0
        %562 = vmatpush2.bf16.msra.mxu0 0
        %563 = vmatprep.mubr.bf16.mxu0 0
        %564 = vmatmul.mubr.bf16.gmra.mxu0 %v359
        %v565 = vpop.f32.mrf.mxu0
        %v566 = vadd.f32 %v510, %v565
        %v567 = vpop.f32.mrf.mxu0
        %v568 = vpop.f32.mrf.mxu0
        %v569 = vadd.f32 %v511, %v568
        %v570 = vpop.f32.mrf.mxu0
        %571 = vdwg.mxu0
        %v572 = vpack.c.bf16 %v569, %v566
        %v574 = vlaneseq
        %v575 = vshrl.u32 %v574, 7
        %v576 = vsub.s32 0, %v575
        %v577 = vrot.slane %v530, %v576
        %v595 = vunpack.c.l.b16 %v513
        %v596 = vunpack.c.l.b16 %v514
        %v597 = vunpack.c.l.b16 %v515
        %v598 = vunpack.c.l.b16 %v516
        %v599 = vunpack.c.l.b16 %v517
        %v600 = vunpack.c.l.b16 %v518
        %v601 = vunpack.c.l.b16 %v519
        %v602 = vunpack.c.l.b16 %v520
        %v603 = vunpack.c.l.b16 %v521
        %v604 = vunpack.c.l.b16 %v522
        %v605 = vunpack.c.l.b16 %v523
        %v606 = vunpack.c.l.b16 %v524
        %v607 = vunpack.c.l.b16 %v525
        %v608 = vunpack.c.l.b16 %v526
        %v609 = vunpack.c.l.b16 %v527
        %v610 = vunpack.c.l.b16 %v528
        %v611 = vpack.c.b16 %v596, %v595
        %v612 = vpack.c.b16 %v598, %v597
        %v613 = vpack.c.b16 %v600, %v599
        %v614 = vpack.c.b16 %v602, %v601
        %v615 = vpack.c.b16 %v604, %v603
        %v616 = vpack.c.b16 %v606, %v605
        %v617 = vpack.c.b16 %v608, %v607
        %v618 = vpack.c.b16 %v610, %v609
        %627 = vmatprep.subr.bf16.mxu0 0
        %628 = vmatpush1.bf16.msra.mxu0 %v618
        %629 = vmatprep.subr.bf16.mxu0 0
        %630 = vmatpush1.bf16.msra.mxu0 %v617
        %631 = vmatprep.subr.bf16.mxu0 0
        %632 = vmatpush1.bf16.msra.mxu0 %v616
        %633 = vmatprep.subr.bf16.mxu0 0
        %634 = vmatpush1.bf16.msra.mxu0 %v615
        %635 = vmatprep.subr.bf16.mxu0 0
        %636 = vmatpush1.bf16.msra.mxu0 %v614
        %637 = vmatprep.subr.bf16.mxu0 0
        %638 = vmatpush1.bf16.msra.mxu0 %v613
        %639 = vmatprep.subr.bf16.mxu0 0
        %640 = vmatpush1.bf16.msra.mxu0 %v612
        %641 = vmatprep.subr.bf16.mxu0 0
        %642 = vmatpush1.bf16.msra.mxu0 %v611
        %643 = vmatprep.subr.bf16.mxu0 0
        %644 = vmatpush2.bf16.msra.mxu0 0
        %645 = vmatprep.subr.bf16.mxu0 0
        %646 = vmatpush2.bf16.msra.mxu0 0
        %647 = vmatprep.subr.bf16.mxu0 0
        %648 = vmatpush2.bf16.msra.mxu0 0
        %649 = vmatprep.subr.bf16.mxu0 0
        %650 = vmatpush2.bf16.msra.mxu0 0
        %651 = vmatprep.subr.bf16.mxu0 0
        %652 = vmatpush2.bf16.msra.mxu0 0
        %653 = vmatprep.subr.bf16.mxu0 0
        %654 = vmatpush2.bf16.msra.mxu0 0
        %655 = vmatprep.subr.bf16.mxu0 0
        %656 = vmatpush2.bf16.msra.mxu0 0
        %657 = vmatprep.subr.bf16.mxu0 0
        %658 = vmatpush2.bf16.msra.mxu0 0
        %659 = vmatprep.mubr.bf16.mxu0 0
        %660 = vmatmul.mubr.bf16.gmra.mxu0 %v572
        %v661 = vpop.f32.mrf.mxu0
        %v662 = vadd.f32 %v577, %v661
        %v663 = vpop.f32.mrf.mxu0
        %v664 = vpop.f32.mrf.mxu0
        %v665 = vadd.f32 %v577, %v664
        %v666 = vpop.f32.mrf.mxu0
        %667 = vdwg.mxu0
        %v668 = vmul.f32 %v662, %v501
        %v669 = vmul.f32 %v665, %v506
        %v670 = vmax.f32 %v668, 0.0
        %v671 = vmax.f32 %v669, 0.0
        %672 = vst [vmem:[%s304] sm:$0xff] %v670
        %673 = vst [vmem:[%s304 + $0x8] sm:$0xff] %v671
        %s674 = sand.u32 %s171, 1
        %s675 = scalar_lea.sflag [#allocation4], %s674
        %s676 = sand.u32 %s171, 1
        %s677 = smul.addr %s676, 16
        %s678 = scalar_lea.vmem [#allocation7], %s677
        // Predicated region
        $region53: #{tpu_custom_call.1} parent=43 // pred_check
          %p679 = pneg %p181
        $region54: #{tpu_custom_call.1} parent=43 // pred_check_branch
          %681 = sbr.rel (%p679) target = $region56
        $region55: #{tpu_custom_call.1} parent=43 // pred_region
          %s683 = ssub.s32 256, 256
          %684 = vsyncadd %s675, %s683
          %s685 = smul.addr %s22, 2
          %s686 = smul.addr %s685, 128
          %s687 = scalar_lea.hbm %s6, %s686
          %s688 = sshll.u32 %s678, 4
          %s689 = int_to_ptr.vmem [resolvable:$true] %s688
          %694 = dma.vmem_to_hbm [thread:$0]  %s689, 256, %s687, %s675, 128, 128, 8
        $region56: #{tpu_custom_call.1} parent=43 // pred_fallthru
          _
      $region44: #{tpu_custom_call.1} parent=5 // pred_fallthru
        _
      %p695 = scmp.le.s32.totalorder 2, %s17
      // Predicated region
      $region57: #{tpu_custom_call.1} parent=5 // pred_check
        %p696 = pneg %p695
      $region58: #{tpu_custom_call.1} parent=5 // pred_check_branch
        %698 = sbr.rel (%p696) target = $region60
      $region59: #{tpu_custom_call.1} parent=5 // pred_region
        %s699 = ssub.s32 %s17, 2
        // Predicated region
        $region61: #{tpu_custom_call.1} parent=59 // pred_check
          %p700 = pneg %p187
        $region62: #{tpu_custom_call.1} parent=59 // pred_check_branch
          %702 = sbr.rel (%p700) target = $region64
        $region63: #{tpu_custom_call.1} parent=59 // pred_region
          %s703 = sand.u32 %s172, 1
          %s704 = scalar_lea.sflag [#allocation4], %s703
          %s705 = sand.u32 %s172, 1
          %s706 = smul.addr %s705, 16
          %s707 = scalar_lea.vmem [#allocation7], %s706
          %708 = dma.done %s704, 256
        $region64: #{tpu_custom_call.1} parent=59 // pred_fallthru
          _
      $region60: #{tpu_custom_call.1} parent=5 // pred_fallthru
        _
    $region6: #{tpu_custom_call.1} parent=1 // loop_footer
      %s21 = sadd.s32 1, %s17
    $region7: #{tpu_custom_call.1} parent=1 // loop_footer_branch
      %16 = sbr.rel target = $region3
    $region8: #{tpu_custom_call.1} parent=1 // loop_exit
      _
    %709 = vsyncpa [#allocation3], 1
    %s710 = scalar_lea.sflag [#allocation3], 1
    %711 = vsyncpa %s710, 1
    %712 = vsyncpa [#allocation6], 1
    %713 = vsyncpa [#allocation4], 1
    %s714 = scalar_lea.sflag [#allocation4], 1
    %715 = vsyncpa %s714, 1

</llo_original>
